<compile_context>
chip_gen: v5e
topology: v5e:2x2
jax: 0.10.0
libtpu: 0.0.40
codegen_flags: <defaults>
</compile_context>

<pallas_src>
import functools

import jax
import jax.numpy as jnp
from jax import lax
from jax.experimental import pallas as pl
from jax.experimental.pallas import tpu as pltpu

VMEM_LIMIT = 32 * 1024 * 1024       # safe on v5e/v6e (128 MiB) and v7x (64 MiB)
NCE_W_BLOCK_BUDGET = 8 * 1024 * 1024  # double-buffered gathered-W block budget


def _round_up(x, m):
    return ((x + m - 1) // m) * m


def _num_tensorcores_per_chip():
    # Only used for tiling decisions; default to 1 if the query fails.
    try:
        kind = jax.devices()[0].device_kind.lower()
        if "v7" in kind:
            return 2
    except Exception:
        pass
    return 1


# --------------------------------------------------------------------------
# Kernel 1: LSTM recurrence.  TS timesteps per grid step; only h @ W_hh and
# the gate math sit on the serial path (x @ W_ih was folded into the
# embedding gather outside the kernel).
# --------------------------------------------------------------------------
def lstm_chunk_kernel(xg_ref, whh_ref, out_ref, h_ref, c_ref):
    # xg_ref:  (TS, bt, 4E) bf16  precomputed x_t @ W_ih + (b_ih + b_hh)
    # whh_ref: (E, 4E)      bf16  hidden->gates weights (resident)
    # out_ref: (TS, bt, E)  bf16  h_t for the TS timesteps of this chunk
    # h_ref/c_ref: (bt, E)  f32   carried LSTM state (VMEM scratch)
    #
    # NOTE: the reset below is only correct because time is the LAST
    # (innermost, fastest-varying) grid axis: for a fixed batch chunk the
    # time-chunk index runs 0..T_chunks-1 consecutively, so program_id(1)==0
    # marks the start of a fresh sequence.  Do not reorder the grid.
    E = h_ref.shape[-1]
    TS = xg_ref.shape[0]

    @pl.when(pl.program_id(1) == 0)
    def _():
        h_ref[...] = jnp.zeros_like(h_ref)
        c_ref[...] = jnp.zeros_like(c_ref)

    def step(s, carry):
        h, c = carry
        gates = xg_ref[s].astype(jnp.float32) + jnp.dot(
            h.astype(jnp.bfloat16), whh_ref[...],
            preferred_element_type=jnp.float32)            # (bt, 4E) f32
        # PyTorch gate order: i, f, g, o.  One EUP pass per (bt, E) slice.
        i = jax.nn.sigmoid(gates[:, 0:E])
        f = jax.nn.sigmoid(gates[:, E:2 * E])
        g = jnp.tanh(gates[:, 2 * E:3 * E])
        o = jax.nn.sigmoid(gates[:, 3 * E:4 * E])
        c_new = f * c + i * g
        h_new = o * jnp.tanh(c_new)
        out_ref[s] = h_new.astype(out_ref.dtype)
        return h_new, c_new

    h, c = lax.fori_loop(0, TS, step, (h_ref[...], c_ref[...]), unroll=True)
    h_ref[...] = h
    c_ref[...] = c


def lstm_recurrence(xg_tm, whh_bf16, bt, ts):
    # xg_tm: (Tpad, Bpad, 4E) bf16 time-major; whh_bf16: (E, 4E)
    Tp, Bp, G = xg_tm.shape
    E = G // 4
    grid = (Bp // bt, Tp // ts)
    return pl.pallas_call(
        lstm_chunk_kernel,
        out_shape=jax.ShapeDtypeStruct((Tp, Bp, E), jnp.bfloat16),
        grid=grid,
        in_specs=[
            pl.BlockSpec((ts, bt, G), lambda b, t: (t, b, 0)),
            pl.BlockSpec((E, G), lambda b, t: (0, 0)),
        ],
        out_specs=pl.BlockSpec((ts, bt, E), lambda b, t: (t, b, 0)),
        scratch_shapes=[
            pltpu.VMEM((bt, E), jnp.float32),   # h
            pltpu.VMEM((bt, E), jnp.float32),   # c
        ],
        compiler_params=pltpu.CompilerParams(
            dimension_semantics=("parallel", "arbitrary"),
            vmem_limit_bytes=VMEM_LIMIT),
    )(xg_tm, whh_bf16)


# --------------------------------------------------------------------------
# Kernel 2: NCE score  sigmoid( sum_e(ctx * W_) + b_ - log(n_noise * Pn_) )
#   Candidate axis K leads so the output block (K, rt) is lane-dense.
# --------------------------------------------------------------------------
def nce_kernel(ctx_ref, w_ref, b_ref, np_ref, out_ref, *, n_noise):
    # ctx_ref: (rt, E)    bf16  LSTM context rows
    # w_ref:   (K, rt, E) bf16  gathered NCE weight rows
    # b_ref:   (K, rt)    f32   gathered NCE bias
    # np_ref:  (K, rt)    f32   gathered noise probabilities Pn[next_w]
    # out_ref: (K, rt)    f32
    ctx = ctx_ref[...]
    prod = ctx[None, :, :] * w_ref[...]                     # bf16 VPU multiply
    s_theta = jnp.sum(prod, axis=-1, dtype=jnp.float32) + b_ref[...]
    # clamp avoids log(0) -> -inf when Pn has zero mass on a real target id
    noise_score = jnp.log(jnp.maximum(np_ref[...] * float(n_noise), 1e-20))
    out_ref[...] = jax.nn.sigmoid(s_theta - noise_score)


def nce_forward(context, w_gathered, b_gathered, noise_p, rt, n_noise):
    # context: (Npad, E) bf16; w_gathered: (K, Npad, E) bf16;
    # b_gathered/noise_p: (K, Npad) f32
    Npad, E = context.shape
    K = b_gathered.shape[0]
    grid = (Npad // rt,)
    kernel = functools.partial(nce_kernel, n_noise=n_noise)
    return pl.pallas_call(
        kernel,
        out_shape=jax.ShapeDtypeStruct((K, Npad), jnp.float32),
        grid=grid,
        in_specs=[
            pl.BlockSpec((rt, E), lambda i: (i, 0)),
            pl.BlockSpec((K, rt, E), lambda i: (0, i, 0)),
            pl.BlockSpec((K, rt), lambda i: (0, i)),
            pl.BlockSpec((K, rt), lambda i: (0, i)),
        ],
        out_specs=pl.BlockSpec((K, rt), lambda i: (0, i)),
        compiler_params=pltpu.CompilerParams(
            dimension_semantics=("parallel",),
            vmem_limit_bytes=VMEM_LIMIT),
    )(context, w_gathered, b_gathered, noise_p)


def _pick_rt(N, K, E):
    rt = 512 if N >= 512 else _round_up(N, 16)
    # keep the double-buffered gathered-W block within a modest VMEM budget,
    # but never drop below 128 lanes (lane-dense stores + (8,128) rule)
    while rt > 128 and 2 * K * rt * E * 2 > NCE_W_BLOCK_BUDGET:
        rt //= 2
    return rt


# --------------------------------------------------------------------------
# Parameter init (matches the PyTorch module's shapes / init intent)
# --------------------------------------------------------------------------
def init_params(key, vocab_size, emb_dim):
    k_emb, k_wih, k_whh, k_bih, k_bhh, k_nce = jax.random.split(key, 6)
    E = emb_dim
    k = 1.0 / jnp.sqrt(E)
    xav = jnp.sqrt(6.0 / (vocab_size + emb_dim))   # xavier_uniform for NCE W
    return {
        "emb_table": jax.random.normal(k_emb, (vocab_size, E), jnp.float32),
        "w_ih": jax.random.uniform(k_wih, (4 * E, E), jnp.float32, -k, k),
        "w_hh": jax.random.uniform(k_whh, (4 * E, E), jnp.float32, -k, k),
        "b_ih": jax.random.uniform(k_bih, (4 * E,), jnp.float32, -k, k),
        "b_hh": jax.random.uniform(k_bhh, (4 * E,), jnp.float32, -k, k),
        "nce_W": jax.random.uniform(k_nce, (vocab_size, E), jnp.float32,
                                    -xav, xav),
        "nce_b": jnp.zeros((vocab_size,), jnp.float32),
    }


# --------------------------------------------------------------------------
# Full UnsupEmb forward (glue in XLA, hot paths in Pallas)
# --------------------------------------------------------------------------
@functools.partial(jax.jit, static_argnames=("n_noise",))
def unsup_emb_forward(params, Pn, x, y, noise_key, n_noise):
    B, T = x.shape
    vocab_size, E = params["emb_table"].shape
    G = 4 * E
    K = n_noise + 1

    # ---- tiling decisions ---------------------------------------------------
    num_tc = _num_tensorcores_per_chip()
    if B <= 256:
        if num_tc >= 2 and B >= 16:
            # >=2 batch chunks so both v7x TensorCores work the recurrence
            bt = min(256, _round_up((B + num_tc - 1) // num_tc, 8))
        else:
            bt = B
    else:
        bt = 256
    Bpad = _round_up(B, bt)

    ts = T if T < 8 else 8              # timesteps per grid step
    Tpad = _round_up(T, ts)

    # ---- time-major layout (only tiny int tensors get transposed) ----------
    x_tm = x.T                                              # (T, B)
    y_tm = y.T                                              # (T, B)
    if Bpad != B or Tpad != T:
        x_tm_p = jnp.pad(x_tm, ((0, Tpad - T), (0, Bpad - B)))
    else:
        x_tm_p = x_tm

    # ---- fold the LSTM input projection into the embedding table -----------
    # proj_table = emb @ W_ih^T + (b_ih + b_hh); the gather below directly
    # yields xg = x_t @ W_ih + bias.  Stored bf16 to halve HBM traffic.
    bias = (params["b_ih"] + params["b_hh"]).astype(jnp.float32)
    proj_table = (params["emb_table"] @ params["w_ih"].T
                  + bias[None, :]).astype(jnp.bfloat16)     # (vocab, 4E)
    whh_bf = params["w_hh"].T.astype(jnp.bfloat16)          # (E, 4E)

    xg_tm = proj_table[x_tm_p]                              # (Tpad, Bpad, 4E) bf16

    # ---- Kernel 1: LSTM recurrence ------------------------------------------
    h_tm = lstm_recurrence(xg_tm, whh_bf, bt, ts)           # (Tpad, Bpad, E) bf16
    context = h_tm[:T, :B, :].reshape(T * B, E)             # rows in (t, b) order

    # ---- noise sampling + NCE gathers (glue) --------------------------------
    noise_w = jax.random.choice(noise_key, vocab_size,
                                shape=(T, B, n_noise), p=Pn)
    next_w = jnp.concatenate([y_tm[:, :, None], noise_w.astype(y_tm.dtype)],
                             axis=-1)                       # (T, B, K)
    next_kn = next_w.reshape(T * B, K).T                    # (K, N)

    N = T * B
    rt = _pick_rt(N, K, E)
    Npad = _round_up(N, rt)
    if Npad != N:
        next_kn = jnp.pad(next_kn, ((0, 0), (0, Npad - N)))
        context = jnp.pad(context, ((0, Npad - N), (0, 0)))

    # TODO(synk): fuse the nce_W row gather into the NCE kernel via
    #             scalar-prefetch driven DMA (memory_space=pl.ANY) to avoid
    #             materializing (K, Npad, E) in HBM.
    W_g = params["nce_W"].astype(jnp.bfloat16)[next_kn]     # (K, Npad, E) bf16
    b_g = params["nce_b"][next_kn]                          # (K, Npad) f32
    noiseP = Pn[next_kn].astype(jnp.float32)                # (K, Npad) f32

    # ---- Kernel 2: NCE score + sigmoid (noise-score log folded in) ----------
    out_kn = nce_forward(context, W_g, b_g, noiseP, rt, n_noise)  # (K, Npad)
    out_ktb = out_kn[:, :N].reshape(K, T, B)
    return jnp.transpose(out_ktb, (2, 1, 0))                # (B, T, K)


if __name__ == "__main__":
    # Small, shape-consistent configuration.
    B, T = 2, 8          # batch, sequence length (inp_len)
    E = 32               # emb_dim (== LSTM hidden)
    VOCAB = 16
    N_NOISE = 7          # -> n_next = 8

    key = jax.random.PRNGKey(0)
    k_params, k_x, k_y, k_noise = jax.random.split(key, 4)

    params = init_params(k_params, VOCAB, E)
    Pn = jnp.ones((VOCAB,), jnp.float32) / VOCAB            # uniform noise dist

    train_x = jax.random.randint(k_x, (B, T), 0, VOCAB, dtype=jnp.int32)
    train_y = jax.random.randint(k_y, (B, T), 0, VOCAB, dtype=jnp.int32)

    out = unsup_emb_forward(params, Pn, train_x, train_y, k_noise, N_NOISE)
    out = jax.block_until_ready(out)

    assert out.shape == (B, T, N_NOISE + 1)
    assert bool(jnp.all(jnp.isfinite(out)))
    assert bool(jnp.all((out >= 0.0) & (out <= 1.0)))
    print("KERNEL_OK")
</pallas_src>

<mosaic_0001>
module attributes {stable_mosaic.version = 11 : i64} {
  func.func @nce_kernel(%arg0: i32, %arg1: memref<16x32xbf16, #tpu.memory_space<vmem>>, %arg2: memref<8x16x32xbf16, #tpu.memory_space<vmem>>, %arg3: memref<8x16xf32, #tpu.memory_space<vmem>>, %arg4: memref<8x16xf32, #tpu.memory_space<vmem>>, %arg5: memref<8x16xf32, #tpu.memory_space<vmem>>) attributes {dimension_semantics = [#tpu.dimension_semantics<parallel>], iteration_bounds = array<i64: 1>, scalar_prefetch = 0 : i64, scratch_operands = 0 : i64, tpu.core_type = #tpu.core_type<tc>, window_params = [{transform_indices = @transform_0, window_bounds = array<i64: 16, 32>}, {transform_indices = @transform_1, window_bounds = array<i64: 8, 16, 32>}, {transform_indices = @transform_2, window_bounds = array<i64: 8, 16>}, {transform_indices = @transform_3, window_bounds = array<i64: 8, 16>}, {transform_indices = @transform_4, window_bounds = array<i64: 8, 16>}]} {
    %c0 = arith.constant 0 : index
    %c0_0 = arith.constant 0 : index
    %0 = vector.load %arg1[%c0, %c0_0] : memref<16x32xbf16, #tpu.memory_space<vmem>>, vector<16x32xbf16>
    %1 = vector.shape_cast %0 : vector<16x32xbf16> to vector<1x16x32xbf16>
    %c0_1 = arith.constant 0 : index
    %c0_2 = arith.constant 0 : index
    %c0_3 = arith.constant 0 : index
    %2 = vector.load %arg2[%c0_1, %c0_2, %c0_3] : memref<8x16x32xbf16, #tpu.memory_space<vmem>>, vector<8x16x32xbf16>
    %3 = vector.broadcast %1 : vector<1x16x32xbf16> to vector<8x16x32xbf16>
    %4 = arith.mulf %3, %2 : vector<8x16x32xbf16>
    %5 = arith.extf %4 : vector<8x16x32xbf16> to vector<8x16x32xf32>
    %cst = arith.constant dense<0.000000e+00> : vector<8x16xf32>
    %6 = vector.multi_reduction <add>, %5, %cst [2] : vector<8x16x32xf32> to vector<8x16xf32>
    %c0_4 = arith.constant 0 : index
    %c0_5 = arith.constant 0 : index
    %7 = vector.load %arg3[%c0_4, %c0_5] : memref<8x16xf32, #tpu.memory_space<vmem>>, vector<8x16xf32>
    %8 = arith.addf %6, %7 : vector<8x16xf32>
    %c0_6 = arith.constant 0 : index
    %c0_7 = arith.constant 0 : index
    %9 = vector.load %arg4[%c0_6, %c0_7] : memref<8x16xf32, #tpu.memory_space<vmem>>, vector<8x16xf32>
    %cst_8 = arith.constant 7.000000e+00 : f32
    %10 = vector.broadcast %cst_8 : f32 to vector<8x16xf32>
    %11 = arith.mulf %9, %10 : vector<8x16xf32>
    %cst_9 = arith.constant 9.99999968E-21 : f32
    %12 = vector.broadcast %cst_9 : f32 to vector<8x16xf32>
    %13 = arith.maximumf %11, %12 : vector<8x16xf32>
    %14 = math.log %13 : vector<8x16xf32>
    %15 = arith.subf %8, %14 : vector<8x16xf32>
    %16 = arith.negf %15 : vector<8x16xf32>
    %17 = math.exp %16 : vector<8x16xf32>
    %cst_10 = arith.constant 1.000000e+00 : f32
    %18 = vector.broadcast %cst_10 : f32 to vector<8x16xf32>
    %19 = arith.addf %18, %17 : vector<8x16xf32>
    %20 = arith.divf %18, %19 : vector<8x16xf32>
    %c0_11 = arith.constant 0 : index
    %c0_12 = arith.constant 0 : index
    %21 = vector.load %arg5[%c0_11, %c0_12] : memref<8x16xf32, #tpu.memory_space<vmem>>, vector<8x16xf32>
    tpu.vector_store %arg5[%c0_11, %c0_12], %20 {strides = array<i32>} : memref<8x16xf32, #tpu.memory_space<vmem>>, vector<8x16xf32>,
    return
  }
  func.func @transform_0(%arg0: i32) -> (i32, i32) {
    %c0_i32 = arith.constant 0 : i32
    %c0_i32_0 = arith.constant 0 : i32
    return %arg0, %c0_i32 : i32, i32
  }
  func.func @transform_1(%arg0: i32) -> (i32, i32, i32) {
    %c0_i32 = arith.constant 0 : i32
    %c0_i32_0 = arith.constant 0 : i32
    %c0_i32_1 = arith.constant 0 : i32
    return %c0_i32, %arg0, %c0_i32_0 : i32, i32, i32
  }
  func.func @transform_2(%arg0: i32) -> (i32, i32) {
    %c0_i32 = arith.constant 0 : i32
    %c0_i32_0 = arith.constant 0 : i32
    return %c0_i32, %arg0 : i32, i32
  }
  func.func @transform_3(%arg0: i32) -> (i32, i32) {
    %c0_i32 = arith.constant 0 : i32
    %c0_i32_0 = arith.constant 0 : i32
    return %c0_i32, %arg0 : i32, i32
  }
  func.func @transform_4(%arg0: i32) -> (i32, i32) {
    %c0_i32 = arith.constant 0 : i32
    %c0_i32_0 = arith.constant 0 : i32
    return %c0_i32, %arg0 : i32, i32
  }
}

module attributes {stable_mosaic.version = 11 : i64} {
  func.func @lstm_chunk_kernel(%arg0: i32, %arg1: i32, %arg2: memref<8x2x128xbf16, #tpu.memory_space<vmem>>, %arg3: memref<32x128xbf16, #tpu.memory_space<vmem>>, %arg4: memref<8x2x32xbf16, #tpu.memory_space<vmem>>, %arg5: memref<2x32xf32, #tpu.memory_space<vmem>>, %arg6: memref<2x32xf32, #tpu.memory_space<vmem>>) attributes {dimension_semantics = [#tpu.dimension_semantics<parallel>, #tpu.dimension_semantics<arbitrary>], iteration_bounds = array<i64: 1, 1>, scalar_prefetch = 0 : i64, scratch_operands = 2 : i64, tpu.core_type = #tpu.core_type<tc>, window_params = [{transform_indices = @transform_0, window_bounds = array<i64: 8, 2, 128>}, {pipeline_mode = #tpu.pipeline_mode<synchronous>, transform_indices = @transform_1, window_bounds = array<i64: 32, 128>}, {transform_indices = @transform_2, window_bounds = array<i64: 8, 2, 32>}]} {
    %c0_i32 = arith.constant 0 : i32
    %0 = arith.cmpi eq, %arg1, %c0_i32 : i32
    %1 = arith.extui %0 : i1 to i32
    %c0_i32_0 = arith.constant 0 : i32
    %2 = arith.cmpi ne, %1, %c0_i32_0 : i32
    scf.if %2 {
      %cst_88 = arith.constant 0.000000e+00 : f32
      %311 = vector.broadcast %cst_88 : f32 to vector<2x32xf32>
      %c0_89 = arith.constant 0 : index
      %c0_90 = arith.constant 0 : index
      %312 = vector.load %arg5[%c0_89, %c0_90] : memref<2x32xf32, #tpu.memory_space<vmem>>, vector<2x32xf32>
      tpu.vector_store %arg5[%c0_89, %c0_90], %311 {strides = array<i32>} : memref<2x32xf32, #tpu.memory_space<vmem>>, vector<2x32xf32>,
      %cst_91 = arith.constant 0.000000e+00 : f32
      %313 = vector.broadcast %cst_91 : f32 to vector<2x32xf32>
      %c0_92 = arith.constant 0 : index
      %c0_93 = arith.constant 0 : index
      %314 = vector.load %arg6[%c0_92, %c0_93] : memref<2x32xf32, #tpu.memory_space<vmem>>, vector<2x32xf32>
      tpu.vector_store %arg6[%c0_92, %c0_93], %313 {strides = array<i32>} : memref<2x32xf32, #tpu.memory_space<vmem>>, vector<2x32xf32>,
    } else {
    }
    %c0 = arith.constant 0 : index
    %c0_1 = arith.constant 0 : index
    %3 = vector.load %arg5[%c0, %c0_1] : memref<2x32xf32, #tpu.memory_space<vmem>>, vector<2x32xf32>
    %c0_2 = arith.constant 0 : index
    %c0_3 = arith.constant 0 : index
    %4 = vector.load %arg6[%c0_2, %c0_3] : memref<2x32xf32, #tpu.memory_space<vmem>>, vector<2x32xf32>
    %c0_i32_4 = arith.constant 0 : i32
    %5 = arith.index_cast %c0_i32_4 : i32 to index
    %c0_5 = arith.constant 0 : index
    %c0_6 = arith.constant 0 : index
    %6 = vector.load %arg2[%5, %c0_5, %c0_6] : memref<8x2x128xbf16, #tpu.memory_space<vmem>>, vector<1x2x128xbf16>
    %7 = vector.shape_cast %6 : vector<1x2x128xbf16> to vector<2x128xbf16>
    %8 = arith.extf %7 : vector<2x128xbf16> to vector<2x128xf32>
    %9 = arith.truncf %3 : vector<2x32xf32> to vector<2x32xbf16>
    %c0_7 = arith.constant 0 : index
    %c0_8 = arith.constant 0 : index
    %10 = vector.load %arg3[%c0_7, %c0_8] : memref<32x128xbf16, #tpu.memory_space<vmem>>, vector<32x128xbf16>
    %cst = arith.constant dense<0.000000e+00> : vector<2x128xf32>
    %11 = tpu.matmul %9, %10, %cst {dimension_numbers = #tpu.dot_dimension_numbers<[1], [0], [0], [1], [0, 0, 1, 1], [], []>} : vector<2x32xbf16>, vector<32x128xbf16>, vector<2x128xf32> -> vector<2x128xf32>
    %12 = arith.addf %8, %11 : vector<2x128xf32>
    %13 = vector.extract_strided_slice %12 {offsets = [0, 0], sizes = [2, 32], strides = [1, 1]} : vector<2x128xf32> to vector<2x32xf32>
    %14 = arith.negf %13 : vector<2x32xf32>
    %15 = math.exp %14 : vector<2x32xf32>
    %cst_9 = arith.constant 1.000000e+00 : f32
    %16 = vector.broadcast %cst_9 : f32 to vector<2x32xf32>
    %17 = arith.addf %16, %15 : vector<2x32xf32>
    %18 = arith.divf %16, %17 : vector<2x32xf32>
    %19 = vector.extract_strided_slice %12 {offsets = [0, 32], sizes = [2, 32], strides = [1, 1]} : vector<2x128xf32> to vector<2x32xf32>
    %20 = arith.negf %19 : vector<2x32xf32>
    %21 = math.exp %20 : vector<2x32xf32>
    %cst_10 = arith.constant 1.000000e+00 : f32
    %22 = vector.broadcast %cst_10 : f32 to vector<2x32xf32>
    %23 = arith.addf %22, %21 : vector<2x32xf32>
    %24 = arith.divf %22, %23 : vector<2x32xf32>
    %25 = vector.extract_strided_slice %12 {offsets = [0, 64], sizes = [2, 32], strides = [1, 1]} : vector<2x128xf32> to vector<2x32xf32>
    %26 = math.tanh %25 : vector<2x32xf32>
    %27 = vector.extract_strided_slice %12 {offsets = [0, 96], sizes = [2, 32], strides = [1, 1]} : vector<2x128xf32> to vector<2x32xf32>
    %28 = arith.negf %27 : vector<2x32xf32>
    %29 = math.exp %28 : vector<2x32xf32>
    %cst_11 = arith.constant 1.000000e+00 : f32
    %30 = vector.broadcast %cst_11 : f32 to vector<2x32xf32>
    %31 = arith.addf %30, %29 : vector<2x32xf32>
    %32 = arith.divf %30, %31 : vector<2x32xf32>
    %33 = arith.mulf %24, %4 : vector<2x32xf32>
    %34 = arith.mulf %18, %26 : vector<2x32xf32>
    %35 = arith.addf %33, %34 : vector<2x32xf32>
    %36 = math.tanh %35 : vector<2x32xf32>
    %37 = arith.mulf %32, %36 : vector<2x32xf32>
    %38 = arith.truncf %37 : vector<2x32xf32> to vector<2x32xbf16>
    %39 = arith.index_cast %c0_i32_4 : i32 to index
    %c0_12 = arith.constant 0 : index
    %c0_13 = arith.constant 0 : index
    %40 = vector.load %arg4[%39, %c0_12, %c0_13] : memref<8x2x32xbf16, #tpu.memory_space<vmem>>, vector<1x2x32xbf16>
    %41 = vector.shape_cast %40 : vector<1x2x32xbf16> to vector<2x32xbf16>
    %42 = vector.shape_cast %38 : vector<2x32xbf16> to vector<1x2x32xbf16>
    tpu.vector_store %arg4[%39, %c0_12, %c0_13], %42 {strides = array<i32>} : memref<8x2x32xbf16, #tpu.memory_space<vmem>>, vector<1x2x32xbf16>,
    %c1_i32 = arith.constant 1 : i32
    %43 = arith.index_cast %c1_i32 : i32 to index
    %c0_14 = arith.constant 0 : index
    %c0_15 = arith.constant 0 : index
    %44 = vector.load %arg2[%43, %c0_14, %c0_15] : memref<8x2x128xbf16, #tpu.memory_space<vmem>>, vector<1x2x128xbf16>
    %45 = vector.shape_cast %44 : vector<1x2x128xbf16> to vector<2x128xbf16>
    %46 = arith.extf %45 : vector<2x128xbf16> to vector<2x128xf32>
    %47 = arith.truncf %37 : vector<2x32xf32> to vector<2x32xbf16>
    %c0_16 = arith.constant 0 : index
    %c0_17 = arith.constant 0 : index
    %48 = vector.load %arg3[%c0_16, %c0_17] : memref<32x128xbf16, #tpu.memory_space<vmem>>, vector<32x128xbf16>
    %cst_18 = arith.constant dense<0.000000e+00> : vector<2x128xf32>
    %49 = tpu.matmul %47, %48, %cst_18 {dimension_numbers = #tpu.dot_dimension_numbers<[1], [0], [0], [1], [0, 0, 1, 1], [], []>} : vector<2x32xbf16>, vector<32x128xbf16>, vector<2x128xf32> -> vector<2x128xf32>
    %50 = arith.addf %46, %49 : vector<2x128xf32>
    %51 = vector.extract_strided_slice %50 {offsets = [0, 0], sizes = [2, 32], strides = [1, 1]} : vector<2x128xf32> to vector<2x32xf32>
    %52 = arith.negf %51 : vector<2x32xf32>
    %53 = math.exp %52 : vector<2x32xf32>
    %cst_19 = arith.constant 1.000000e+00 : f32
    %54 = vector.broadcast %cst_19 : f32 to vector<2x32xf32>
    %55 = arith.addf %54, %53 : vector<2x32xf32>
    %56 = arith.divf %54, %55 : vector<2x32xf32>
    %57 = vector.extract_strided_slice %50 {offsets = [0, 32], sizes = [2, 32], strides = [1, 1]} : vector<2x128xf32> to vector<2x32xf32>
    %58 = arith.negf %57 : vector<2x32xf32>
    %59 = math.exp %58 : vector<2x32xf32>
    %cst_20 = arith.constant 1.000000e+00 : f32
    %60 = vector.broadcast %cst_20 : f32 to vector<2x32xf32>
    %61 = arith.addf %60, %59 : vector<2x32xf32>
    %62 = arith.divf %60, %61 : vector<2x32xf32>
    %63 = vector.extract_strided_slice %50 {offsets = [0, 64], sizes = [2, 32], strides = [1, 1]} : vector<2x128xf32> to vector<2x32xf32>
    %64 = math.tanh %63 : vector<2x32xf32>
    %65 = vector.extract_strided_slice %50 {offsets = [0, 96], sizes = [2, 32], strides = [1, 1]} : vector<2x128xf32> to vector<2x32xf32>
    %66 = arith.negf %65 : vector<2x32xf32>
    %67 = math.exp %66 : vector<2x32xf32>
    %cst_21 = arith.constant 1.000000e+00 : f32
    %68 = vector.broadcast %cst_21 : f32 to vector<2x32xf32>
    %69 = arith.addf %68, %67 : vector<2x32xf32>
    %70 = arith.divf %68, %69 : vector<2x32xf32>
    %71 = arith.mulf %62, %35 : vector<2x32xf32>
    %72 = arith.mulf %56, %64 : vector<2x32xf32>
    %73 = arith.addf %71, %72 : vector<2x32xf32>
    %74 = math.tanh %73 : vector<2x32xf32>
    %75 = arith.mulf %70, %74 : vector<2x32xf32>
    %76 = arith.truncf %75 : vector<2x32xf32> to vector<2x32xbf16>
    %77 = arith.index_cast %c1_i32 : i32 to index
    %c0_22 = arith.constant 0 : index
    %c0_23 = arith.constant 0 : index
    %78 = vector.load %arg4[%77, %c0_22, %c0_23] : memref<8x2x32xbf16, #tpu.memory_space<vmem>>, vector<1x2x32xbf16>
    %79 = vector.shape_cast %78 : vector<1x2x32xbf16> to vector<2x32xbf16>
    %80 = vector.shape_cast %76 : vector<2x32xbf16> to vector<1x2x32xbf16>
    tpu.vector_store %arg4[%77, %c0_22, %c0_23], %80 {strides = array<i32>} : memref<8x2x32xbf16, #tpu.memory_space<vmem>>, vector<1x2x32xbf16>,
    %c2_i32 = arith.constant 2 : i32
    %81 = arith.index_cast %c2_i32 : i32 to index
    %c0_24 = arith.constant 0 : index
    %c0_25 = arith.constant 0 : index
    %82 = vector.load %arg2[%81, %c0_24, %c0_25] : memref<8x2x128xbf16, #tpu.memory_space<vmem>>, vector<1x2x128xbf16>
    %83 = vector.shape_cast %82 : vector<1x2x128xbf16> to vector<2x128xbf16>
    %84 = arith.extf %83 : vector<2x128xbf16> to vector<2x128xf32>
    %85 = arith.truncf %75 : vector<2x32xf32> to vector<2x32xbf16>
    %c0_26 = arith.constant 0 : index
    %c0_27 = arith.constant 0 : index
    %86 = vector.load %arg3[%c0_26, %c0_27] : memref<32x128xbf16, #tpu.memory_space<vmem>>, vector<32x128xbf16>
    %cst_28 = arith.constant dense<0.000000e+00> : vector<2x128xf32>
    %87 = tpu.matmul %85, %86, %cst_28 {dimension_numbers = #tpu.dot_dimension_numbers<[1], [0], [0], [1], [0, 0, 1, 1], [], []>} : vector<2x32xbf16>, vector<32x128xbf16>, vector<2x128xf32> -> vector<2x128xf32>
    %88 = arith.addf %84, %87 : vector<2x128xf32>
    %89 = vector.extract_strided_slice %88 {offsets = [0, 0], sizes = [2, 32], strides = [1, 1]} : vector<2x128xf32> to vector<2x32xf32>
    %90 = arith.negf %89 : vector<2x32xf32>
    %91 = math.exp %90 : vector<2x32xf32>
    %cst_29 = arith.constant 1.000000e+00 : f32
    %92 = vector.broadcast %cst_29 : f32 to vector<2x32xf32>
    %93 = arith.addf %92, %91 : vector<2x32xf32>
    %94 = arith.divf %92, %93 : vector<2x32xf32>
    %95 = vector.extract_strided_slice %88 {offsets = [0, 32], sizes = [2, 32], strides = [1, 1]} : vector<2x128xf32> to vector<2x32xf32>
    %96 = arith.negf %95 : vector<2x32xf32>
    %97 = math.exp %96 : vector<2x32xf32>
    %cst_30 = arith.constant 1.000000e+00 : f32
    %98 = vector.broadcast %cst_30 : f32 to vector<2x32xf32>
    %99 = arith.addf %98, %97 : vector<2x32xf32>
    %100 = arith.divf %98, %99 : vector<2x32xf32>
    %101 = vector.extract_strided_slice %88 {offsets = [0, 64], sizes = [2, 32], strides = [1, 1]} : vector<2x128xf32> to vector<2x32xf32>
    %102 = math.tanh %101 : vector<2x32xf32>
    %103 = vector.extract_strided_slice %88 {offsets = [0, 96], sizes = [2, 32], strides = [1, 1]} : vector<2x128xf32> to vector<2x32xf32>
    %104 = arith.negf %103 : vector<2x32xf32>
    %105 = math.exp %104 : vector<2x32xf32>
    %cst_31 = arith.constant 1.000000e+00 : f32
    %106 = vector.broadcast %cst_31 : f32 to vector<2x32xf32>
    %107 = arith.addf %106, %105 : vector<2x32xf32>
    %108 = arith.divf %106, %107 : vector<2x32xf32>
    %109 = arith.mulf %100, %73 : vector<2x32xf32>
    %110 = arith.mulf %94, %102 : vector<2x32xf32>
    %111 = arith.addf %109, %110 : vector<2x32xf32>
    %112 = math.tanh %111 : vector<2x32xf32>
    %113 = arith.mulf %108, %112 : vector<2x32xf32>
    %114 = arith.truncf %113 : vector<2x32xf32> to vector<2x32xbf16>
    %115 = arith.index_cast %c2_i32 : i32 to index
    %c0_32 = arith.constant 0 : index
    %c0_33 = arith.constant 0 : index
    %116 = vector.load %arg4[%115, %c0_32, %c0_33] : memref<8x2x32xbf16, #tpu.memory_space<vmem>>, vector<1x2x32xbf16>
    %117 = vector.shape_cast %116 : vector<1x2x32xbf16> to vector<2x32xbf16>
    %118 = vector.shape_cast %114 : vector<2x32xbf16> to vector<1x2x32xbf16>
    tpu.vector_store %arg4[%115, %c0_32, %c0_33], %118 {strides = array<i32>} : memref<8x2x32xbf16, #tpu.memory_space<vmem>>, vector<1x2x32xbf16>,
    %c3_i32 = arith.constant 3 : i32
    %119 = arith.index_cast %c3_i32 : i32 to index
    %c0_34 = arith.constant 0 : index
    %c0_35 = arith.constant 0 : index
    %120 = vector.load %arg2[%119, %c0_34, %c0_35] : memref<8x2x128xbf16, #tpu.memory_space<vmem>>, vector<1x2x128xbf16>
    %121 = vector.shape_cast %120 : vector<1x2x128xbf16> to vector<2x128xbf16>
    %122 = arith.extf %121 : vector<2x128xbf16> to vector<2x128xf32>
    %123 = arith.truncf %113 : vector<2x32xf32> to vector<2x32xbf16>
    %c0_36 = arith.constant 0 : index
    %c0_37 = arith.constant 0 : index
    %124 = vector.load %arg3[%c0_36, %c0_37] : memref<32x128xbf16, #tpu.memory_space<vmem>>, vector<32x128xbf16>
    %cst_38 = arith.constant dense<0.000000e+00> : vector<2x128xf32>
    %125 = tpu.matmul %123, %124, %cst_38 {dimension_numbers = #tpu.dot_dimension_numbers<[1], [0], [0], [1], [0, 0, 1, 1], [], []>} : vector<2x32xbf16>, vector<32x128xbf16>, vector<2x128xf32> -> vector<2x128xf32>
    %126 = arith.addf %122, %125 : vector<2x128xf32>
    %127 = vector.extract_strided_slice %126 {offsets = [0, 0], sizes = [2, 32], strides = [1, 1]} : vector<2x128xf32> to vector<2x32xf32>
    %128 = arith.negf %127 : vector<2x32xf32>
    %129 = math.exp %128 : vector<2x32xf32>
    %cst_39 = arith.constant 1.000000e+00 : f32
    %130 = vector.broadcast %cst_39 : f32 to vector<2x32xf32>
    %131 = arith.addf %130, %129 : vector<2x32xf32>
    %132 = arith.divf %130, %131 : vector<2x32xf32>
    %133 = vector.extract_strided_slice %126 {offsets = [0, 32], sizes = [2, 32], strides = [1, 1]} : vector<2x128xf32> to vector<2x32xf32>
    %134 = arith.negf %133 : vector<2x32xf32>
    %135 = math.exp %134 : vector<2x32xf32>
    %cst_40 = arith.constant 1.000000e+00 : f32
    %136 = vector.broadcast %cst_40 : f32 to vector<2x32xf32>
    %137 = arith.addf %136, %135 : vector<2x32xf32>
    %138 = arith.divf %136, %137 : vector<2x32xf32>
    %139 = vector.extract_strided_slice %126 {offsets = [0, 64], sizes = [2, 32], strides = [1, 1]} : vector<2x128xf32> to vector<2x32xf32>
    %140 = math.tanh %139 : vector<2x32xf32>
    %141 = vector.extract_strided_slice %126 {offsets = [0, 96], sizes = [2, 32], strides = [1, 1]} : vector<2x128xf32> to vector<2x32xf32>
    %142 = arith.negf %141 : vector<2x32xf32>
    %143 = math.exp %142 : vector<2x32xf32>
    %cst_41 = arith.constant 1.000000e+00 : f32
    %144 = vector.broadcast %cst_41 : f32 to vector<2x32xf32>
    %145 = arith.addf %144, %143 : vector<2x32xf32>
    %146 = arith.divf %144, %145 : vector<2x32xf32>
    %147 = arith.mulf %138, %111 : vector<2x32xf32>
    %148 = arith.mulf %132, %140 : vector<2x32xf32>
    %149 = arith.addf %147, %148 : vector<2x32xf32>
    %150 = math.tanh %149 : vector<2x32xf32>
    %151 = arith.mulf %146, %150 : vector<2x32xf32>
    %152 = arith.truncf %151 : vector<2x32xf32> to vector<2x32xbf16>
    %153 = arith.index_cast %c3_i32 : i32 to index
    %c0_42 = arith.constant 0 : index
    %c0_43 = arith.constant 0 : index
    %154 = vector.load %arg4[%153, %c0_42, %c0_43] : memref<8x2x32xbf16, #tpu.memory_space<vmem>>, vector<1x2x32xbf16>
    %155 = vector.shape_cast %154 : vector<1x2x32xbf16> to vector<2x32xbf16>
    %156 = vector.shape_cast %152 : vector<2x32xbf16> to vector<1x2x32xbf16>
    tpu.vector_store %arg4[%153, %c0_42, %c0_43], %156 {strides = array<i32>} : memref<8x2x32xbf16, #tpu.memory_space<vmem>>, vector<1x2x32xbf16>,
    %c4_i32 = arith.constant 4 : i32
    %157 = arith.index_cast %c4_i32 : i32 to index
    %c0_44 = arith.constant 0 : index
    %c0_45 = arith.constant 0 : index
    %158 = vector.load %arg2[%157, %c0_44, %c0_45] : memref<8x2x128xbf16, #tpu.memory_space<vmem>>, vector<1x2x128xbf16>
    %159 = vector.shape_cast %158 : vector<1x2x128xbf16> to vector<2x128xbf16>
    %160 = arith.extf %159 : vector<2x128xbf16> to vector<2x128xf32>
    %161 = arith.truncf %151 : vector<2x32xf32> to vector<2x32xbf16>
    %c0_46 = arith.constant 0 : index
    %c0_47 = arith.constant 0 : index
    %162 = vector.load %arg3[%c0_46, %c0_47] : memref<32x128xbf16, #tpu.memory_space<vmem>>, vector<32x128xbf16>
    %cst_48 = arith.constant dense<0.000000e+00> : vector<2x128xf32>
    %163 = tpu.matmul %161, %162, %cst_48 {dimension_numbers = #tpu.dot_dimension_numbers<[1], [0], [0], [1], [0, 0, 1, 1], [], []>} : vector<2x32xbf16>, vector<32x128xbf16>, vector<2x128xf32> -> vector<2x128xf32>
    %164 = arith.addf %160, %163 : vector<2x128xf32>
    %165 = vector.extract_strided_slice %164 {offsets = [0, 0], sizes = [2, 32], strides = [1, 1]} : vector<2x128xf32> to vector<2x32xf32>
    %166 = arith.negf %165 : vector<2x32xf32>
    %167 = math.exp %166 : vector<2x32xf32>
    %cst_49 = arith.constant 1.000000e+00 : f32
    %168 = vector.broadcast %cst_49 : f32 to vector<2x32xf32>
    %169 = arith.addf %168, %167 : vector<2x32xf32>
    %170 = arith.divf %168, %169 : vector<2x32xf32>
    %171 = vector.extract_strided_slice %164 {offsets = [0, 32], sizes = [2, 32], strides = [1, 1]} : vector<2x128xf32> to vector<2x32xf32>
    %172 = arith.negf %171 : vector<2x32xf32>
    %173 = math.exp %172 : vector<2x32xf32>
    %cst_50 = arith.constant 1.000000e+00 : f32
    %174 = vector.broadcast %cst_50 : f32 to vector<2x32xf32>
    %175 = arith.addf %174, %173 : vector<2x32xf32>
    %176 = arith.divf %174, %175 : vector<2x32xf32>
    %177 = vector.extract_strided_slice %164 {offsets = [0, 64], sizes = [2, 32], strides = [1, 1]} : vector<2x128xf32> to vector<2x32xf32>
    %178 = math.tanh %177 : vector<2x32xf32>
    %179 = vector.extract_strided_slice %164 {offsets = [0, 96], sizes = [2, 32], strides = [1, 1]} : vector<2x128xf32> to vector<2x32xf32>
    %180 = arith.negf %179 : vector<2x32xf32>
    %181 = math.exp %180 : vector<2x32xf32>
    %cst_51 = arith.constant 1.000000e+00 : f32
    %182 = vector.broadcast %cst_51 : f32 to vector<2x32xf32>
    %183 = arith.addf %182, %181 : vector<2x32xf32>
    %184 = arith.divf %182, %183 : vector<2x32xf32>
    %185 = arith.mulf %176, %149 : vector<2x32xf32>
    %186 = arith.mulf %170, %178 : vector<2x32xf32>
    %187 = arith.addf %185, %186 : vector<2x32xf32>
    %188 = math.tanh %187 : vector<2x32xf32>
    %189 = arith.mulf %184, %188 : vector<2x32xf32>
    %190 = arith.truncf %189 : vector<2x32xf32> to vector<2x32xbf16>
    %191 = arith.index_cast %c4_i32 : i32 to index
    %c0_52 = arith.constant 0 : index
    %c0_53 = arith.constant 0 : index
    %192 = vector.load %arg4[%191, %c0_52, %c0_53] : memref<8x2x32xbf16, #tpu.memory_space<vmem>>, vector<1x2x32xbf16>
    %193 = vector.shape_cast %192 : vector<1x2x32xbf16> to vector<2x32xbf16>
    %194 = vector.shape_cast %190 : vector<2x32xbf16> to vector<1x2x32xbf16>
    tpu.vector_store %arg4[%191, %c0_52, %c0_53], %194 {strides = array<i32>} : memref<8x2x32xbf16, #tpu.memory_space<vmem>>, vector<1x2x32xbf16>,
    %c5_i32 = arith.constant 5 : i32
    %195 = arith.index_cast %c5_i32 : i32 to index
    %c0_54 = arith.constant 0 : index
    %c0_55 = arith.constant 0 : index
    %196 = vector.load %arg2[%195, %c0_54, %c0_55] : memref<8x2x128xbf16, #tpu.memory_space<vmem>>, vector<1x2x128xbf16>
    %197 = vector.shape_cast %196 : vector<1x2x128xbf16> to vector<2x128xbf16>
    %198 = arith.extf %197 : vector<2x128xbf16> to vector<2x128xf32>
    %199 = arith.truncf %189 : vector<2x32xf32> to vector<2x32xbf16>
    %c0_56 = arith.constant 0 : index
    %c0_57 = arith.constant 0 : index
    %200 = vector.load %arg3[%c0_56, %c0_57] : memref<32x128xbf16, #tpu.memory_space<vmem>>, vector<32x128xbf16>
    %cst_58 = arith.constant dense<0.000000e+00> : vector<2x128xf32>
    %201 = tpu.matmul %199, %200, %cst_58 {dimension_numbers = #tpu.dot_dimension_numbers<[1], [0], [0], [1], [0, 0, 1, 1], [], []>} : vector<2x32xbf16>, vector<32x128xbf16>, vector<2x128xf32> -> vector<2x128xf32>
    %202 = arith.addf %198, %201 : vector<2x128xf32>
    %203 = vector.extract_strided_slice %202 {offsets = [0, 0], sizes = [2, 32], strides = [1, 1]} : vector<2x128xf32> to vector<2x32xf32>
    %204 = arith.negf %203 : vector<2x32xf32>
    %205 = math.exp %204 : vector<2x32xf32>
    %cst_59 = arith.constant 1.000000e+00 : f32
    %206 = vector.broadcast %cst_59 : f32 to vector<2x32xf32>
    %207 = arith.addf %206, %205 : vector<2x32xf32>
    %208 = arith.divf %206, %207 : vector<2x32xf32>
    %209 = vector.extract_strided_slice %202 {offsets = [0, 32], sizes = [2, 32], strides = [1, 1]} : vector<2x128xf32> to vector<2x32xf32>
    %210 = arith.negf %209 : vector<2x32xf32>
    %211 = math.exp %210 : vector<2x32xf32>
    %cst_60 = arith.constant 1.000000e+00 : f32
    %212 = vector.broadcast %cst_60 : f32 to vector<2x32xf32>
    %213 = arith.addf %212, %211 : vector<2x32xf32>
    %214 = arith.divf %212, %213 : vector<2x32xf32>
    %215 = vector.extract_strided_slice %202 {offsets = [0, 64], sizes = [2, 32], strides = [1, 1]} : vector<2x128xf32> to vector<2x32xf32>
    %216 = math.tanh %215 : vector<2x32xf32>
    %217 = vector.extract_strided_slice %202 {offsets = [0, 96], sizes = [2, 32], strides = [1, 1]} : vector<2x128xf32> to vector<2x32xf32>
    %218 = arith.negf %217 : vector<2x32xf32>
    %219 = math.exp %218 : vector<2x32xf32>
    %cst_61 = arith.constant 1.000000e+00 : f32
    %220 = vector.broadcast %cst_61 : f32 to vector<2x32xf32>
    %221 = arith.addf %220, %219 : vector<2x32xf32>
    %222 = arith.divf %220, %221 : vector<2x32xf32>
    %223 = arith.mulf %214, %187 : vector<2x32xf32>
    %224 = arith.mulf %208, %216 : vector<2x32xf32>
    %225 = arith.addf %223, %224 : vector<2x32xf32>
    %226 = math.tanh %225 : vector<2x32xf32>
    %227 = arith.mulf %222, %226 : vector<2x32xf32>
    %228 = arith.truncf %227 : vector<2x32xf32> to vector<2x32xbf16>
    %229 = arith.index_cast %c5_i32 : i32 to index
    %c0_62 = arith.constant 0 : index
    %c0_63 = arith.constant 0 : index
    %230 = vector.load %arg4[%229, %c0_62, %c0_63] : memref<8x2x32xbf16, #tpu.memory_space<vmem>>, vector<1x2x32xbf16>
    %231 = vector.shape_cast %230 : vector<1x2x32xbf16> to vector<2x32xbf16>
    %232 = vector.shape_cast %228 : vector<2x32xbf16> to vector<1x2x32xbf16>
    tpu.vector_store %arg4[%229, %c0_62, %c0_63], %232 {strides = array<i32>} : memref<8x2x32xbf16, #tpu.memory_space<vmem>>, vector<1x2x32xbf16>,
    %c6_i32 = arith.constant 6 : i32
    %233 = arith.index_cast %c6_i32 : i32 to index
    %c0_64 = arith.constant 0 : index
    %c0_65 = arith.constant 0 : index
    %234 = vector.load %arg2[%233, %c0_64, %c0_65] : memref<8x2x128xbf16, #tpu.memory_space<vmem>>, vector<1x2x128xbf16>
    %235 = vector.shape_cast %234 : vector<1x2x128xbf16> to vector<2x128xbf16>
    %236 = arith.extf %235 : vector<2x128xbf16> to vector<2x128xf32>
    %237 = arith.truncf %227 : vector<2x32xf32> to vector<2x32xbf16>
    %c0_66 = arith.constant 0 : index
    %c0_67 = arith.constant 0 : index
    %238 = vector.load %arg3[%c0_66, %c0_67] : memref<32x128xbf16, #tpu.memory_space<vmem>>, vector<32x128xbf16>
    %cst_68 = arith.constant dense<0.000000e+00> : vector<2x128xf32>
    %239 = tpu.matmul %237, %238, %cst_68 {dimension_numbers = #tpu.dot_dimension_numbers<[1], [0], [0], [1], [0, 0, 1, 1], [], []>} : vector<2x32xbf16>, vector<32x128xbf16>, vector<2x128xf32> -> vector<2x128xf32>
    %240 = arith.addf %236, %239 : vector<2x128xf32>
    %241 = vector.extract_strided_slice %240 {offsets = [0, 0], sizes = [2, 32], strides = [1, 1]} : vector<2x128xf32> to vector<2x32xf32>
    %242 = arith.negf %241 : vector<2x32xf32>
    %243 = math.exp %242 : vector<2x32xf32>
    %cst_69 = arith.constant 1.000000e+00 : f32
    %244 = vector.broadcast %cst_69 : f32 to vector<2x32xf32>
    %245 = arith.addf %244, %243 : vector<2x32xf32>
    %246 = arith.divf %244, %245 : vector<2x32xf32>
    %247 = vector.extract_strided_slice %240 {offsets = [0, 32], sizes = [2, 32], strides = [1, 1]} : vector<2x128xf32> to vector<2x32xf32>
    %248 = arith.negf %247 : vector<2x32xf32>
    %249 = math.exp %248 : vector<2x32xf32>
    %cst_70 = arith.constant 1.000000e+00 : f32
    %250 = vector.broadcast %cst_70 : f32 to vector<2x32xf32>
    %251 = arith.addf %250, %249 : vector<2x32xf32>
    %252 = arith.divf %250, %251 : vector<2x32xf32>
    %253 = vector.extract_strided_slice %240 {offsets = [0, 64], sizes = [2, 32], strides = [1, 1]} : vector<2x128xf32> to vector<2x32xf32>
    %254 = math.tanh %253 : vector<2x32xf32>
    %255 = vector.extract_strided_slice %240 {offsets = [0, 96], sizes = [2, 32], strides = [1, 1]} : vector<2x128xf32> to vector<2x32xf32>
    %256 = arith.negf %255 : vector<2x32xf32>
    %257 = math.exp %256 : vector<2x32xf32>
    %cst_71 = arith.constant 1.000000e+00 : f32
    %258 = vector.broadcast %cst_71 : f32 to vector<2x32xf32>
    %259 = arith.addf %258, %257 : vector<2x32xf32>
    %260 = arith.divf %258, %259 : vector<2x32xf32>
    %261 = arith.mulf %252, %225 : vector<2x32xf32>
    %262 = arith.mulf %246, %254 : vector<2x32xf32>
    %263 = arith.addf %261, %262 : vector<2x32xf32>
    %264 = math.tanh %263 : vector<2x32xf32>
    %265 = arith.mulf %260, %264 : vector<2x32xf32>
    %266 = arith.truncf %265 : vector<2x32xf32> to vector<2x32xbf16>
    %267 = arith.index_cast %c6_i32 : i32 to index
    %c0_72 = arith.constant 0 : index
    %c0_73 = arith.constant 0 : index
    %268 = vector.load %arg4[%267, %c0_72, %c0_73] : memref<8x2x32xbf16, #tpu.memory_space<vmem>>, vector<1x2x32xbf16>
    %269 = vector.shape_cast %268 : vector<1x2x32xbf16> to vector<2x32xbf16>
    %270 = vector.shape_cast %266 : vector<2x32xbf16> to vector<1x2x32xbf16>
    tpu.vector_store %arg4[%267, %c0_72, %c0_73], %270 {strides = array<i32>} : memref<8x2x32xbf16, #tpu.memory_space<vmem>>, vector<1x2x32xbf16>,
    %c7_i32 = arith.constant 7 : i32
    %271 = arith.index_cast %c7_i32 : i32 to index
    %c0_74 = arith.constant 0 : index
    %c0_75 = arith.constant 0 : index
    %272 = vector.load %arg2[%271, %c0_74, %c0_75] : memref<8x2x128xbf16, #tpu.memory_space<vmem>>, vector<1x2x128xbf16>
    %273 = vector.shape_cast %272 : vector<1x2x128xbf16> to vector<2x128xbf16>
    %274 = arith.extf %273 : vector<2x128xbf16> to vector<2x128xf32>
    %275 = arith.truncf %265 : vector<2x32xf32> to vector<2x32xbf16>
    %c0_76 = arith.constant 0 : index
    %c0_77 = arith.constant 0 : index
    %276 = vector.load %arg3[%c0_76, %c0_77] : memref<32x128xbf16, #tpu.memory_space<vmem>>, vector<32x128xbf16>
    %cst_78 = arith.constant dense<0.000000e+00> : vector<2x128xf32>
    %277 = tpu.matmul %275, %276, %cst_78 {dimension_numbers = #tpu.dot_dimension_numbers<[1], [0], [0], [1], [0, 0, 1, 1], [], []>} : vector<2x32xbf16>, vector<32x128xbf16>, vector<2x128xf32> -> vector<2x128xf32>
    %278 = arith.addf %274, %277 : vector<2x128xf32>
    %279 = vector.extract_strided_slice %278 {offsets = [0, 0], sizes = [2, 32], strides = [1, 1]} : vector<2x128xf32> to vector<2x32xf32>
    %280 = arith.negf %279 : vector<2x32xf32>
    %281 = math.exp %280 : vector<2x32xf32>
    %cst_79 = arith.constant 1.000000e+00 : f32
    %282 = vector.broadcast %cst_79 : f32 to vector<2x32xf32>
    %283 = arith.addf %282, %281 : vector<2x32xf32>
    %284 = arith.divf %282, %283 : vector<2x32xf32>
    %285 = vector.extract_strided_slice %278 {offsets = [0, 32], sizes = [2, 32], strides = [1, 1]} : vector<2x128xf32> to vector<2x32xf32>
    %286 = arith.negf %285 : vector<2x32xf32>
    %287 = math.exp %286 : vector<2x32xf32>
    %cst_80 = arith.constant 1.000000e+00 : f32
    %288 = vector.broadcast %cst_80 : f32 to vector<2x32xf32>
    %289 = arith.addf %288, %287 : vector<2x32xf32>
    %290 = arith.divf %288, %289 : vector<2x32xf32>
    %291 = vector.extract_strided_slice %278 {offsets = [0, 64], sizes = [2, 32], strides = [1, 1]} : vector<2x128xf32> to vector<2x32xf32>
    %292 = math.tanh %291 : vector<2x32xf32>
    %293 = vector.extract_strided_slice %278 {offsets = [0, 96], sizes = [2, 32], strides = [1, 1]} : vector<2x128xf32> to vector<2x32xf32>
    %294 = arith.negf %293 : vector<2x32xf32>
    %295 = math.exp %294 : vector<2x32xf32>
    %cst_81 = arith.constant 1.000000e+00 : f32
    %296 = vector.broadcast %cst_81 : f32 to vector<2x32xf32>
    %297 = arith.addf %296, %295 : vector<2x32xf32>
    %298 = arith.divf %296, %297 : vector<2x32xf32>
    %299 = arith.mulf %290, %263 : vector<2x32xf32>
    %300 = arith.mulf %284, %292 : vector<2x32xf32>
    %301 = arith.addf %299, %300 : vector<2x32xf32>
    %302 = math.tanh %301 : vector<2x32xf32>
    %303 = arith.mulf %298, %302 : vector<2x32xf32>
    %304 = arith.truncf %303 : vector<2x32xf32> to vector<2x32xbf16>
    %305 = arith.index_cast %c7_i32 : i32 to index
    %c0_82 = arith.constant 0 : index
    %c0_83 = arith.constant 0 : index
    %306 = vector.load %arg4[%305, %c0_82, %c0_83] : memref<8x2x32xbf16, #tpu.memory_space<vmem>>, vector<1x2x32xbf16>
    %307 = vector.shape_cast %306 : vector<1x2x32xbf16> to vector<2x32xbf16>
    %308 = vector.shape_cast %304 : vector<2x32xbf16> to vector<1x2x32xbf16>
    tpu.vector_store %arg4[%305, %c0_82, %c0_83], %308 {strides = array<i32>} : memref<8x2x32xbf16, #tpu.memory_space<vmem>>, vector<1x2x32xbf16>,
    %c8_i32 = arith.constant 8 : i32
    %c0_84 = arith.constant 0 : index
    %c0_85 = arith.constant 0 : index
    %309 = vector.load %arg5[%c0_84, %c0_85] : memref<2x32xf32, #tpu.memory_space<vmem>>, vector<2x32xf32>
    tpu.vector_store %arg5[%c0_84, %c0_85], %303 {strides = array<i32>} : memref<2x32xf32, #tpu.memory_space<vmem>>, vector<2x32xf32>,
    %c0_86 = arith.constant 0 : index
    %c0_87 = arith.constant 0 : index
    %310 = vector.load %arg6[%c0_86, %c0_87] : memref<2x32xf32, #tpu.memory_space<vmem>>, vector<2x32xf32>
    tpu.vector_store %arg6[%c0_86, %c0_87], %301 {strides = array<i32>} : memref<2x32xf32, #tpu.memory_space<vmem>>, vector<2x32xf32>,
    return
  }
  func.func @transform_0(%arg0: i32, %arg1: i32) -> (i32, i32, i32) {
    %c0_i32 = arith.constant 0 : i32
    %c0_i32_0 = arith.constant 0 : i32
    return %arg1, %arg0, %c0_i32 : i32, i32, i32
  }
  func.func @transform_1(%arg0: i32, %arg1: i32) -> (i32, i32) {
    %c0_i32 = arith.constant 0 : i32
    %c0_i32_0 = arith.constant 0 : i32
    %c0_i32_1 = arith.constant 0 : i32
    return %c0_i32, %c0_i32_0 : i32, i32
  }
  func.func @transform_2(%arg0: i32, %arg1: i32) -> (i32, i32, i32) {
    %c0_i32 = arith.constant 0 : i32
    %c0_i32_0 = arith.constant 0 : i32
    return %arg1, %arg0, %c0_i32 : i32, i32, i32
  }
}

</mosaic_0001>

<llo_original>
// kernel: custom-call
$region0: #{custom-call}
  %s0 = inlined_call_operand.vmem [shape: u32[8,2,7], index: 0, kind: output, shape index: {}]

// kernel: squeeze.9
$region0: #{squeeze.9}
  %s0 = inlined_call_operand.vmem [shape: f32[112], index: 0, kind: input, shape index: {}]
  %s1 = inlined_call_operand.vmem [shape: f32[8,2,7], index: 1, kind: output, shape index: {}]
  $region1: #{squeeze.9} parent=0
    #allocation0 [shape = 'u8[32768]{0}', space=vmem, size = 0x8000, scoped, tag = 'scoped mem for output reshape']
    #allocation1 [shape = 'u8[4096]{0}', space=vmem, size = 0x1000, scoped, tag = 'scoped mem for input reshape']
    %s3 = ssub.s32 2, 1
    %v4 = vld [vmem:[%s0] sm:%s3]
    %5 = vst [vmem:[#allocation1] sm:%s3] %v4
    %v6 = vld [vmem:[#allocation1] sm:$0x1]
    %vm7 = vcmask 56320
    %8 = vst.msk [vmem:[#allocation0] sm:$0x1] %vm7, %v6
    %v9 = vld [vmem:[#allocation1] sm:$0x1]
    %10 = vrot.lane.b32.xlu0 %v9, 121
    %v11 = vpop.permute.xlu0 %10
    %vm12 = vcmask 56320
    %s13 = scalar_lea.vmem [#allocation0], 1
    %14 = vst.msk [vmem:[%s13] sm:$0x1] %vm12, %v11
    %v15 = vld [vmem:[#allocation1] sm:$0x1]
    %16 = vrot.lane.b32.xlu0 %v15, 114
    %v17 = vpop.permute.xlu0 %16
    %vm18 = vcmask 56320
    %s19 = scalar_lea.vmem [#allocation0], 8
    %20 = vst.msk [vmem:[%s19] sm:$0x1] %vm18, %v17
    %v21 = vld [vmem:[#allocation1] sm:$0x1]
    %22 = vrot.lane.b32.xlu0 %v21, 107
    %v23 = vpop.permute.xlu0 %22
    %vm24 = vcmask 56320
    %s25 = scalar_lea.vmem [#allocation0], 9
    %26 = vst.msk [vmem:[%s25] sm:$0x1] %vm24, %v23
    %v27 = vld [vmem:[#allocation1] sm:$0x1]
    %28 = vrot.lane.b32.xlu0 %v27, 100
    %v29 = vpop.permute.xlu0 %28
    %vm30 = vcmask 56320
    %s31 = scalar_lea.vmem [#allocation0], 16
    %32 = vst.msk [vmem:[%s31] sm:$0x1] %vm30, %v29
    %v33 = vld [vmem:[#allocation1] sm:$0x1]
    %34 = vrot.lane.b32.xlu0 %v33, 93
    %v35 = vpop.permute.xlu0 %34
    %vm36 = vcmask 56320
    %s37 = scalar_lea.vmem [#allocation0], 17
    %38 = vst.msk [vmem:[%s37] sm:$0x1] %vm36, %v35
    %v39 = vld [vmem:[#allocation1] sm:$0x1]
    %40 = vrot.lane.b32.xlu0 %v39, 86
    %v41 = vpop.permute.xlu0 %40
    %vm42 = vcmask 56320
    %s43 = scalar_lea.vmem [#allocation0], 24
    %44 = vst.msk [vmem:[%s43] sm:$0x1] %vm42, %v41
    %v45 = vld [vmem:[#allocation1] sm:$0x1]
    %46 = vrot.lane.b32.xlu0 %v45, 79
    %v47 = vpop.permute.xlu0 %46
    %vm48 = vcmask 56320
    %s49 = scalar_lea.vmem [#allocation0], 25
    %50 = vst.msk [vmem:[%s49] sm:$0x1] %vm48, %v47
    %v51 = vld [vmem:[#allocation1] sm:$0x1]
    %52 = vrot.lane.b32.xlu0 %v51, 72
    %v53 = vpop.permute.xlu0 %52
    %vm54 = vcmask 56320
    %s55 = scalar_lea.vmem [#allocation0], 32
    %56 = vst.msk [vmem:[%s55] sm:$0x1] %vm54, %v53
    %v57 = vld [vmem:[#allocation1] sm:$0x1]
    %58 = vrot.lane.b32.xlu0 %v57, 65
    %v59 = vpop.permute.xlu0 %58
    %vm60 = vcmask 56320
    %s61 = scalar_lea.vmem [#allocation0], 33
    %62 = vst.msk [vmem:[%s61] sm:$0x1] %vm60, %v59
    %v63 = vld [vmem:[#allocation1] sm:$0x1]
    %64 = vrot.lane.b32.xlu0 %v63, 58
    %v65 = vpop.permute.xlu0 %64
    %vm66 = vcmask 56320
    %s67 = scalar_lea.vmem [#allocation0], 40
    %68 = vst.msk [vmem:[%s67] sm:$0x1] %vm66, %v65
    %v69 = vld [vmem:[#allocation1] sm:$0x1]
    %70 = vrot.lane.b32.xlu0 %v69, 51
    %v71 = vpop.permute.xlu0 %70
    %vm72 = vcmask 56320
    %s73 = scalar_lea.vmem [#allocation0], 41
    %74 = vst.msk [vmem:[%s73] sm:$0x1] %vm72, %v71
    %v75 = vld [vmem:[#allocation1] sm:$0x1]
    %76 = vrot.lane.b32.xlu0 %v75, 44
    %v77 = vpop.permute.xlu0 %76
    %vm78 = vcmask 56320
    %s79 = scalar_lea.vmem [#allocation0], 48
    %80 = vst.msk [vmem:[%s79] sm:$0x1] %vm78, %v77
    %v81 = vld [vmem:[#allocation1] sm:$0x1]
    %82 = vrot.lane.b32.xlu0 %v81, 37
    %v83 = vpop.permute.xlu0 %82
    %vm84 = vcmask 56320
    %s85 = scalar_lea.vmem [#allocation0], 49
    %86 = vst.msk [vmem:[%s85] sm:$0x1] %vm84, %v83
    %v87 = vld [vmem:[#allocation1] sm:$0x1]
    %88 = vrot.lane.b32.xlu0 %v87, 30
    %v89 = vpop.permute.xlu0 %88
    %vm90 = vcmask 56320
    %s91 = scalar_lea.vmem [#allocation0], 56
    %92 = vst.msk [vmem:[%s91] sm:$0x1] %vm90, %v89
    %v93 = vld [vmem:[#allocation1] sm:$0x1]
    %94 = vrot.lane.b32.xlu0 %v93, 23
    %v95 = vpop.permute.xlu0 %94
    %vm96 = vcmask 56320
    %s97 = scalar_lea.vmem [#allocation0], 57
    %98 = vst.msk [vmem:[%s97] sm:$0x1] %vm96, %v95
    %s100 = ssub.s32 4, 1
    %v101 = vld [vmem:[#allocation0] sm:%s100]
    %s103 = ssub.s32 4, 1
    %104 = vst [vmem:[%s1] sm:%s103] %v101
    %s105 = scalar_lea.vmem [#allocation0], 8
    %v106 = vld [vmem:[%s105] sm:%s100]
    %s108 = ssub.s32 4, 1
    %s109 = scalar_lea.vmem %s1, 2
    %110 = vst [vmem:[%s109] sm:%s108] %v106
    %s111 = scalar_lea.vmem [#allocation0], 16
    %v112 = vld [vmem:[%s111] sm:%s100]
    %s114 = ssub.s32 4, 1
    %s115 = scalar_lea.vmem %s1, 4
    %116 = vst [vmem:[%s115] sm:%s114] %v112
    %s117 = scalar_lea.vmem [#allocation0], 24
    %v118 = vld [vmem:[%s117] sm:%s100]
    %s120 = ssub.s32 4, 1
    %s121 = scalar_lea.vmem %s1, 6
    %122 = vst [vmem:[%s121] sm:%s120] %v118
    %s123 = scalar_lea.vmem [#allocation0], 32
    %v124 = vld [vmem:[%s123] sm:%s100]
    %s126 = ssub.s32 4, 1
    %s127 = scalar_lea.vmem %s1, 8
    %128 = vst [vmem:[%s127] sm:%s126] %v124
    %s129 = scalar_lea.vmem [#allocation0], 40
    %v130 = vld [vmem:[%s129] sm:%s100]
    %s132 = ssub.s32 4, 1
    %s133 = scalar_lea.vmem %s1, 10
    %134 = vst [vmem:[%s133] sm:%s132] %v130
    %s135 = scalar_lea.vmem [#allocation0], 48
    %v136 = vld [vmem:[%s135] sm:%s100]
    %s138 = ssub.s32 4, 1
    %s139 = scalar_lea.vmem %s1, 12
    %140 = vst [vmem:[%s139] sm:%s138] %v136
    %s141 = scalar_lea.vmem [#allocation0], 56
    %v142 = vld [vmem:[%s141] sm:%s100]
    %s144 = ssub.s32 4, 1
    %s145 = scalar_lea.vmem %s1, 14
    %146 = vst [vmem:[%s145] sm:%s144] %v142

// kernel: unsup_emb_forward.3
$region0: #{unsup_emb_forward.3}
  #allocation0 [shape = 'u32[]', space=smem, size = 0x4, offset = 0x4, fixed_abs, tag = 'smem constant byte address 0x4 - core index']
  #allocation1 [shape = 'u32[72,128]{1,0:T(1,128)}', space=vmem, size = 0x9000, scoped, tag = 'internal scratch']
  %s0 = inlined_call_operand.vmem [shape: bf16[16,32], index: 0, kind: input, shape index: {}]
  %s1 = inlined_call_operand.vmem [shape: bf16[8,16,32], index: 1, kind: input, shape index: {}]
  %s2 = inlined_call_operand.vmem [shape: f32[8,16], index: 2, kind: input, shape index: {}]
  %s3 = inlined_call_operand.vmem [shape: f32[8,16], index: 3, kind: input, shape index: {}]
  %s4 = inlined_call_operand.vmem [shape: f32[8,16], index: 4, kind: output, shape index: {}]
  %s5 = sld [smem:[#allocation0]]
  $region26: #{unsup_emb_forward.3} parent=0
    _
  %s7 = ssub.s32 1, %s5
  %s8 = scalar_select 0, %s7, %s5
  // Predicated region
  $region2: #{unsup_emb_forward.3} parent=0 // pred_check
    _
  $region3: #{unsup_emb_forward.3} parent=0 // pred_check_branch
    %10 = sbr.rel (0) target = $region5
  $region4: #{unsup_emb_forward.3} parent=0 // pred_region
    _
  $region5: #{unsup_emb_forward.3} parent=0 // pred_fallthru
    _
  // Predicated region
  $region6: #{unsup_emb_forward.3} parent=0 // pred_check
    _
  $region7: #{unsup_emb_forward.3} parent=0 // pred_check_branch
    %12 = sbr.rel (0) target = $region9
  $region8: #{unsup_emb_forward.3} parent=0 // pred_region
    _
  $region9: #{unsup_emb_forward.3} parent=0 // pred_fallthru
    _
  // Predicated region
  $region10: #{unsup_emb_forward.3} parent=0 // pred_check
    _
  $region11: #{unsup_emb_forward.3} parent=0 // pred_check_branch
    %14 = sbr.rel (0) target = $region13
  $region12: #{unsup_emb_forward.3} parent=0 // pred_region
    _
  $region13: #{unsup_emb_forward.3} parent=0 // pred_fallthru
    _
  // Predicated region
  $region14: #{unsup_emb_forward.3} parent=0 // pred_check
    _
  $region15: #{unsup_emb_forward.3} parent=0 // pred_check_branch
    %16 = sbr.rel (0) target = $region17
  $region16: #{unsup_emb_forward.3} parent=0 // pred_region
    _
  $region17: #{unsup_emb_forward.3} parent=0 // pred_fallthru
    _
  %v17 = vld [vmem:[%s0] sm:$0xf]
  %v18 = vld [vmem:[%s0 + $0x4] sm:$0xf]
  %v19 = vld [vmem:[%s1] sm:$0xf]
  %v20 = vld [vmem:[%s1 + $0x4] sm:$0xf]
  %v21 = vld [vmem:[%s1 + $0x8] sm:$0xf]
  %v22 = vld [vmem:[%s1 + $0xc] sm:$0xf]
  %v23 = vld [vmem:[%s1 + $0x10] sm:$0xf]
  %v24 = vld [vmem:[%s1 + $0x14] sm:$0xf]
  %v25 = vld [vmem:[%s1 + $0x18] sm:$0xf]
  %v26 = vld [vmem:[%s1 + $0x1c] sm:$0xf]
  %v27 = vld [vmem:[%s1 + $0x20] sm:$0xf]
  %v28 = vld [vmem:[%s1 + $0x24] sm:$0xf]
  %v29 = vld [vmem:[%s1 + $0x28] sm:$0xf]
  %v30 = vld [vmem:[%s1 + $0x2c] sm:$0xf]
  %v31 = vld [vmem:[%s1 + $0x30] sm:$0xf]
  %v32 = vld [vmem:[%s1 + $0x34] sm:$0xf]
  %v33 = vld [vmem:[%s1 + $0x38] sm:$0xf]
  %v34 = vld [vmem:[%s1 + $0x3c] sm:$0xf]
  %v35 = vunpack.c.l.bf16 %v17
  %v36 = vunpack.c.l.bf16 %v18
  %v37 = vunpack.c.l.bf16 %v19
  %v38 = vunpack.c.l.bf16 %v20
  %v39 = vunpack.c.l.bf16 %v21
  %v40 = vunpack.c.l.bf16 %v22
  %v41 = vunpack.c.l.bf16 %v23
  %v42 = vunpack.c.l.bf16 %v24
  %v43 = vunpack.c.l.bf16 %v25
  %v44 = vunpack.c.l.bf16 %v26
  %v45 = vunpack.c.l.bf16 %v27
  %v46 = vunpack.c.l.bf16 %v28
  %v47 = vunpack.c.l.bf16 %v29
  %v48 = vunpack.c.l.bf16 %v30
  %v49 = vunpack.c.l.bf16 %v31
  %v50 = vunpack.c.l.bf16 %v32
  %v51 = vunpack.c.l.bf16 %v33
  %v52 = vunpack.c.l.bf16 %v34
  %v53 = vmul.f32 %v35, %v37
  %v54 = vmul.f32 %v36, %v38
  %v55 = vmul.f32 %v35, %v39
  %v56 = vmul.f32 %v36, %v40
  %v57 = vmul.f32 %v35, %v41
  %v58 = vmul.f32 %v36, %v42
  %v59 = vmul.f32 %v35, %v43
  %v60 = vmul.f32 %v36, %v44
  %v61 = vmul.f32 %v35, %v45
  %v62 = vmul.f32 %v36, %v46
  %v63 = vmul.f32 %v35, %v47
  %v64 = vmul.f32 %v36, %v48
  %v65 = vmul.f32 %v35, %v49
  %v66 = vmul.f32 %v36, %v50
  %v67 = vmul.f32 %v35, %v51
  %v68 = vmul.f32 %v36, %v52
  %v69 = vpack.c.bf16 %v54, %v53
  %v70 = vpack.c.bf16 %v56, %v55
  %v71 = vpack.c.bf16 %v58, %v57
  %v72 = vpack.c.bf16 %v60, %v59
  %v73 = vpack.c.bf16 %v62, %v61
  %v74 = vpack.c.bf16 %v64, %v63
  %v75 = vpack.c.bf16 %v66, %v65
  %v76 = vpack.c.bf16 %v68, %v67
  %v77 = vunpack.c.l.bf16 %v69
  %v78 = vunpack.c.h.bf16 %v69
  %v79 = vunpack.c.l.bf16 %v70
  %v80 = vunpack.c.h.bf16 %v70
  %v81 = vunpack.c.l.bf16 %v71
  %v82 = vunpack.c.h.bf16 %v71
  %v83 = vunpack.c.l.bf16 %v72
  %v84 = vunpack.c.h.bf16 %v72
  %v85 = vunpack.c.l.bf16 %v73
  %v86 = vunpack.c.h.bf16 %v73
  %v87 = vunpack.c.l.bf16 %v74
  %v88 = vunpack.c.h.bf16 %v74
  %v89 = vunpack.c.l.bf16 %v75
  %v90 = vunpack.c.h.bf16 %v75
  %v91 = vunpack.c.l.bf16 %v76
  %v92 = vunpack.c.h.bf16 %v76
  %vm93 = vcmask 261120
  %v94 = vsel %vm93, %v77, 0.0
  %95 = vadd.xlane.f32.xlu0 %v94
  %v96 = vpop.xlane.xlu0 %95
  %v97 = vsel %vm93, %v78, 0.0
  %98 = vadd.xlane.f32.xlu0 %v97
  %v99 = vpop.xlane.xlu0 %98
  %v100 = vsel %vm93, %v79, 0.0
  %101 = vadd.xlane.f32.xlu0 %v100
  %v102 = vpop.xlane.xlu0 %101
  %v103 = vsel %vm93, %v80, 0.0
  %104 = vadd.xlane.f32.xlu0 %v103
  %v105 = vpop.xlane.xlu0 %104
  %v106 = vsel %vm93, %v81, 0.0
  %107 = vadd.xlane.f32.xlu0 %v106
  %v108 = vpop.xlane.xlu0 %107
  %v109 = vsel %vm93, %v82, 0.0
  %110 = vadd.xlane.f32.xlu0 %v109
  %v111 = vpop.xlane.xlu0 %110
  %v112 = vsel %vm93, %v83, 0.0
  %113 = vadd.xlane.f32.xlu0 %v112
  %v114 = vpop.xlane.xlu0 %113
  %v115 = vsel %vm93, %v84, 0.0
  %116 = vadd.xlane.f32.xlu0 %v115
  %v117 = vpop.xlane.xlu0 %116
  %v118 = vsel %vm93, %v85, 0.0
  %119 = vadd.xlane.f32.xlu0 %v118
  %v120 = vpop.xlane.xlu0 %119
  %v121 = vsel %vm93, %v86, 0.0
  %122 = vadd.xlane.f32.xlu0 %v121
  %v123 = vpop.xlane.xlu0 %122
  %v124 = vsel %vm93, %v87, 0.0
  %125 = vadd.xlane.f32.xlu0 %v124
  %v126 = vpop.xlane.xlu0 %125
  %v127 = vsel %vm93, %v88, 0.0
  %128 = vadd.xlane.f32.xlu0 %v127
  %v129 = vpop.xlane.xlu0 %128
  %v130 = vsel %vm93, %v89, 0.0
  %131 = vadd.xlane.f32.xlu0 %v130
  %v132 = vpop.xlane.xlu0 %131
  %v133 = vsel %vm93, %v90, 0.0
  %134 = vadd.xlane.f32.xlu0 %v133
  %v135 = vpop.xlane.xlu0 %134
  %v136 = vsel %vm93, %v91, 0.0
  %137 = vadd.xlane.f32.xlu0 %v136
  %v138 = vpop.xlane.xlu0 %137
  %v139 = vsel %vm93, %v92, 0.0
  %140 = vadd.xlane.f32.xlu0 %v139
  %v141 = vpop.xlane.xlu0 %140
  %v142 = vld [vmem:[%s2] sm:$0xff]
  %v144 = vperm.slane %v142, 0
  %v145 = vlaneseq
  %v146 = vshrl.u32 %v145, 7
  %148 = vset.pattern.permute.xlu0 %v146
  %149 = vperm.xlu0 %148, %v144
  %v150 = vpop.permute.xlu0 %149
  %v151 = vlaneseq
  %v152 = vshrl.u32 %v151, 7
  %v153 = vadd.s32 %v152, 8
  %154 = vset.pattern.permute.xlu0 %v153
  %155 = vperm.xlu0 %154, %v144
  %v156 = vpop.permute.xlu0 %155
  %v157 = vperm.slane %v142, 1
  %v158 = vlaneseq
  %v159 = vshrl.u32 %v158, 7
  %161 = vset.pattern.permute.xlu0 %v159
  %162 = vperm.xlu0 %161, %v157
  %v163 = vpop.permute.xlu0 %162
  %v164 = vlaneseq
  %v165 = vshrl.u32 %v164, 7
  %v166 = vadd.s32 %v165, 8
  %167 = vset.pattern.permute.xlu0 %v166
  %168 = vperm.xlu0 %167, %v157
  %v169 = vpop.permute.xlu0 %168
  %v170 = vperm.slane %v142, 2
  %v171 = vlaneseq
  %v172 = vshrl.u32 %v171, 7
  %174 = vset.pattern.permute.xlu0 %v172
  %175 = vperm.xlu0 %174, %v170
  %v176 = vpop.permute.xlu0 %175
  %v177 = vlaneseq
  %v178 = vshrl.u32 %v177, 7
  %v179 = vadd.s32 %v178, 8
  %180 = vset.pattern.permute.xlu0 %v179
  %181 = vperm.xlu0 %180, %v170
  %v182 = vpop.permute.xlu0 %181
  %v183 = vperm.slane %v142, 3
  %v184 = vlaneseq
  %v185 = vshrl.u32 %v184, 7
  %187 = vset.pattern.permute.xlu0 %v185
  %188 = vperm.xlu0 %187, %v183
  %v189 = vpop.permute.xlu0 %188
  %v190 = vlaneseq
  %v191 = vshrl.u32 %v190, 7
  %v192 = vadd.s32 %v191, 8
  %193 = vset.pattern.permute.xlu0 %v192
  %194 = vperm.xlu0 %193, %v183
  %v195 = vpop.permute.xlu0 %194
  %v196 = vperm.slane %v142, 4
  %v197 = vlaneseq
  %v198 = vshrl.u32 %v197, 7
  %200 = vset.pattern.permute.xlu0 %v198
  %201 = vperm.xlu0 %200, %v196
  %v202 = vpop.permute.xlu0 %201
  %v203 = vlaneseq
  %v204 = vshrl.u32 %v203, 7
  %v205 = vadd.s32 %v204, 8
  %206 = vset.pattern.permute.xlu0 %v205
  %207 = vperm.xlu0 %206, %v196
  %v208 = vpop.permute.xlu0 %207
  %v209 = vperm.slane %v142, 5
  %v210 = vlaneseq
  %v211 = vshrl.u32 %v210, 7
  %213 = vset.pattern.permute.xlu0 %v211
  %214 = vperm.xlu0 %213, %v209
  %v215 = vpop.permute.xlu0 %214
  %v216 = vlaneseq
  %v217 = vshrl.u32 %v216, 7
  %v218 = vadd.s32 %v217, 8
  %219 = vset.pattern.permute.xlu0 %v218
  %220 = vperm.xlu0 %219, %v209
  %v221 = vpop.permute.xlu0 %220
  %v222 = vperm.slane %v142, 6
  %v223 = vlaneseq
  %v224 = vshrl.u32 %v223, 7
  %226 = vset.pattern.permute.xlu0 %v224
  %227 = vperm.xlu0 %226, %v222
  %v228 = vpop.permute.xlu0 %227
  %v229 = vlaneseq
  %v230 = vshrl.u32 %v229, 7
  %v231 = vadd.s32 %v230, 8
  %232 = vset.pattern.permute.xlu0 %v231
  %233 = vperm.xlu0 %232, %v222
  %v234 = vpop.permute.xlu0 %233
  %v235 = vperm.slane %v142, 7
  %v236 = vlaneseq
  %v237 = vshrl.u32 %v236, 7
  %239 = vset.pattern.permute.xlu0 %v237
  %240 = vperm.xlu0 %239, %v235
  %v241 = vpop.permute.xlu0 %240
  %v242 = vlaneseq
  %v243 = vshrl.u32 %v242, 7
  %v244 = vadd.s32 %v243, 8
  %245 = vset.pattern.permute.xlu0 %v244
  %246 = vperm.xlu0 %245, %v235
  %v247 = vpop.permute.xlu0 %246
  %v264 = vadd.f32 %v96, %v150
  %v265 = vadd.f32 %v99, %v156
  %v266 = vadd.f32 %v102, %v163
  %v267 = vadd.f32 %v105, %v169
  %v268 = vadd.f32 %v108, %v176
  %v269 = vadd.f32 %v111, %v182
  %v270 = vadd.f32 %v114, %v189
  %v271 = vadd.f32 %v117, %v195
  %v272 = vadd.f32 %v120, %v202
  %v273 = vadd.f32 %v123, %v208
  %v274 = vadd.f32 %v126, %v215
  %v275 = vadd.f32 %v129, %v221
  %v276 = vadd.f32 %v132, %v228
  %v277 = vadd.f32 %v135, %v234
  %v278 = vadd.f32 %v138, %v241
  %v279 = vadd.f32 %v141, %v247
  %v280 = vld [vmem:[%s3] sm:$0xff]
  %v281 = vmul.f32 %v280, 7.0
  %v282 = vmax.f32 %v281, 1e-20
  %v283 = vlog2.pop %v282
  %v284 = vmul.f32 %v283, 0.6931472
  %v286 = vperm.slane %v284, 0
  %v287 = vlaneseq
  %v288 = vshrl.u32 %v287, 7
  %290 = vset.pattern.permute.xlu0 %v288
  %291 = vperm.xlu0 %290, %v286
  %v292 = vpop.permute.xlu0 %291
  %v293 = vlaneseq
  %v294 = vshrl.u32 %v293, 7
  %v295 = vadd.s32 %v294, 8
  %296 = vset.pattern.permute.xlu0 %v295
  %297 = vperm.xlu0 %296, %v286
  %v298 = vpop.permute.xlu0 %297
  %v299 = vperm.slane %v284, 1
  %v300 = vlaneseq
  %v301 = vshrl.u32 %v300, 7
  %303 = vset.pattern.permute.xlu0 %v301
  %304 = vperm.xlu0 %303, %v299
  %v305 = vpop.permute.xlu0 %304
  %v306 = vlaneseq
  %v307 = vshrl.u32 %v306, 7
  %v308 = vadd.s32 %v307, 8
  %309 = vset.pattern.permute.xlu0 %v308
  %310 = vperm.xlu0 %309, %v299
  %v311 = vpop.permute.xlu0 %310
  %v312 = vperm.slane %v284, 2
  %v313 = vlaneseq
  %v314 = vshrl.u32 %v313, 7
  %316 = vset.pattern.permute.xlu0 %v314
  %317 = vperm.xlu0 %316, %v312
  %v318 = vpop.permute.xlu0 %317
  %v319 = vlaneseq
  %v320 = vshrl.u32 %v319, 7
  %v321 = vadd.s32 %v320, 8
  %322 = vset.pattern.permute.xlu0 %v321
  %323 = vperm.xlu0 %322, %v312
  %v324 = vpop.permute.xlu0 %323
  %v325 = vperm.slane %v284, 3
  %v326 = vlaneseq
  %v327 = vshrl.u32 %v326, 7
  %329 = vset.pattern.permute.xlu0 %v327
  %330 = vperm.xlu0 %329, %v325
  %v331 = vpop.permute.xlu0 %330
  %v332 = vlaneseq
  %v333 = vshrl.u32 %v332, 7
  %v334 = vadd.s32 %v333, 8
  %335 = vset.pattern.permute.xlu0 %v334
  %336 = vperm.xlu0 %335, %v325
  %v337 = vpop.permute.xlu0 %336
  %v338 = vperm.slane %v284, 4
  %v339 = vlaneseq
  %v340 = vshrl.u32 %v339, 7
  %342 = vset.pattern.permute.xlu0 %v340
  %343 = vperm.xlu0 %342, %v338
  %v344 = vpop.permute.xlu0 %343
  %v345 = vlaneseq
  %v346 = vshrl.u32 %v345, 7
  %v347 = vadd.s32 %v346, 8
  %348 = vset.pattern.permute.xlu0 %v347
  %349 = vperm.xlu0 %348, %v338
  %v350 = vpop.permute.xlu0 %349
  %v351 = vperm.slane %v284, 5
  %v352 = vlaneseq
  %v353 = vshrl.u32 %v352, 7
  %355 = vset.pattern.permute.xlu0 %v353
  %356 = vperm.xlu0 %355, %v351
  %v357 = vpop.permute.xlu0 %356
  %v358 = vlaneseq
  %v359 = vshrl.u32 %v358, 7
  %v360 = vadd.s32 %v359, 8
  %361 = vset.pattern.permute.xlu0 %v360
  %362 = vperm.xlu0 %361, %v351
  %v363 = vpop.permute.xlu0 %362
  %v364 = vperm.slane %v284, 6
  %v365 = vlaneseq
  %v366 = vshrl.u32 %v365, 7
  %368 = vset.pattern.permute.xlu0 %v366
  %369 = vperm.xlu0 %368, %v364
  %v370 = vpop.permute.xlu0 %369
  %v371 = vlaneseq
  %v372 = vshrl.u32 %v371, 7
  %v373 = vadd.s32 %v372, 8
  %374 = vset.pattern.permute.xlu0 %v373
  %375 = vperm.xlu0 %374, %v364
  %v376 = vpop.permute.xlu0 %375
  %v377 = vperm.slane %v284, 7
  %v378 = vlaneseq
  %v379 = vshrl.u32 %v378, 7
  %381 = vset.pattern.permute.xlu0 %v379
  %382 = vperm.xlu0 %381, %v377
  %v383 = vpop.permute.xlu0 %382
  %v384 = vlaneseq
  %v385 = vshrl.u32 %v384, 7
  %v386 = vadd.s32 %v385, 8
  %387 = vset.pattern.permute.xlu0 %v386
  %388 = vperm.xlu0 %387, %v377
  %v389 = vpop.permute.xlu0 %388
  %v406 = vsub.f32 %v264, %v292
  %v407 = vsub.f32 %v265, %v298
  %v408 = vsub.f32 %v266, %v305
  %v409 = vsub.f32 %v267, %v311
  %v410 = vsub.f32 %v268, %v318
  %v411 = vsub.f32 %v269, %v324
  %v412 = vsub.f32 %v270, %v331
  %v413 = vsub.f32 %v271, %v337
  %v414 = vsub.f32 %v272, %v344
  %v415 = vsub.f32 %v273, %v350
  %v416 = vsub.f32 %v274, %v357
  %v417 = vsub.f32 %v275, %v363
  %v418 = vsub.f32 %v276, %v370
  %v419 = vsub.f32 %v277, %v376
  %v420 = vsub.f32 %v278, %v383
  %v421 = vsub.f32 %v279, %v389
  %v422 = vxor.u32 %v406, 2147483648
  %v423 = vxor.u32 %v407, 2147483648
  %v424 = vxor.u32 %v408, 2147483648
  %v425 = vxor.u32 %v409, 2147483648
  %v426 = vxor.u32 %v410, 2147483648
  %v427 = vxor.u32 %v411, 2147483648
  %v428 = vxor.u32 %v412, 2147483648
  %v429 = vxor.u32 %v413, 2147483648
  %v430 = vxor.u32 %v414, 2147483648
  %v431 = vxor.u32 %v415, 2147483648
  %v432 = vxor.u32 %v416, 2147483648
  %v433 = vxor.u32 %v417, 2147483648
  %v434 = vxor.u32 %v418, 2147483648
  %v435 = vxor.u32 %v419, 2147483648
  %v436 = vxor.u32 %v420, 2147483648
  %v437 = vxor.u32 %v421, 2147483648
  %v438 = vmul.f32 %v422, 1.442695
  %v439 = vpow.pop %v438
  %v440 = vmul.f32 %v423, 1.442695
  %v441 = vpow.pop %v440
  %v442 = vmul.f32 %v424, 1.442695
  %v443 = vpow.pop %v442
  %v444 = vmul.f32 %v425, 1.442695
  %v445 = vpow.pop %v444
  %v446 = vmul.f32 %v426, 1.442695
  %v447 = vpow.pop %v446
  %v448 = vmul.f32 %v427, 1.442695
  %v449 = vpow.pop %v448
  %v450 = vmul.f32 %v428, 1.442695
  %v451 = vpow.pop %v450
  %v452 = vmul.f32 %v429, 1.442695
  %v453 = vpow.pop %v452
  %v454 = vmul.f32 %v430, 1.442695
  %v455 = vpow.pop %v454
  %v456 = vmul.f32 %v431, 1.442695
  %v457 = vpow.pop %v456
  %v458 = vmul.f32 %v432, 1.442695
  %v459 = vpow.pop %v458
  %v460 = vmul.f32 %v433, 1.442695
  %v461 = vpow.pop %v460
  %v462 = vmul.f32 %v434, 1.442695
  %v463 = vpow.pop %v462
  %v464 = vmul.f32 %v435, 1.442695
  %v465 = vpow.pop %v464
  %v466 = vmul.f32 %v436, 1.442695
  %v467 = vpow.pop %v466
  %v468 = vmul.f32 %v437, 1.442695
  %v469 = vpow.pop %v468
  %v470 = vadd.f32 %v439, 1.0
  %v471 = vadd.f32 %v441, 1.0
  %v472 = vadd.f32 %v443, 1.0
  %v473 = vadd.f32 %v445, 1.0
  %v474 = vadd.f32 %v447, 1.0
  %v475 = vadd.f32 %v449, 1.0
  %v476 = vadd.f32 %v451, 1.0
  %v477 = vadd.f32 %v453, 1.0
  %v478 = vadd.f32 %v455, 1.0
  %v479 = vadd.f32 %v457, 1.0
  %v480 = vadd.f32 %v459, 1.0
  %v481 = vadd.f32 %v461, 1.0
  %v482 = vadd.f32 %v463, 1.0
  %v483 = vadd.f32 %v465, 1.0
  %v484 = vadd.f32 %v467, 1.0
  %v485 = vadd.f32 %v469, 1.0
  %v486 = vrcp.pop %v470
  %v487 = vmul.f32 %v470, %v486
  %v488 = vsub.f32 1.0, %v487
  %v489 = vmul.f32 %v486, %v488
  %v490 = vadd.f32 %v486, %v489
  %vm491 = vweird.f32 %v470
  %vm492 = vweird.f32 %v486
  %vm493 = vmor %vm491, %vm492
  %v494 = vsel %vm493, %v486, %v490
  %v495 = vand.u32 2147483647, %v470
  %vm496 = vcmp.eq.f32.partialorder %v495, 8.507059e+37
  %v497 = vand.u32 %v470, 2147483648
  %v498 = vor.u32 1.1754944e-38, %v497
  %v499 = vsel %vm496, %v498, %v494
  %v500 = vmul.f32 1.0, %v499
  %v501 = vrcp.pop %v471
  %v502 = vmul.f32 %v471, %v501
  %v503 = vsub.f32 1.0, %v502
  %v504 = vmul.f32 %v501, %v503
  %v505 = vadd.f32 %v501, %v504
  %vm506 = vweird.f32 %v471
  %vm507 = vweird.f32 %v501
  %vm508 = vmor %vm506, %vm507
  %v509 = vsel %vm508, %v501, %v505
  %v510 = vand.u32 2147483647, %v471
  %vm511 = vcmp.eq.f32.partialorder %v510, 8.507059e+37
  %v512 = vand.u32 %v471, 2147483648
  %v513 = vor.u32 1.1754944e-38, %v512
  %v514 = vsel %vm511, %v513, %v509
  %v515 = vmul.f32 1.0, %v514
  %v516 = vrcp.pop %v472
  %v517 = vmul.f32 %v472, %v516
  %v518 = vsub.f32 1.0, %v517
  %v519 = vmul.f32 %v516, %v518
  %v520 = vadd.f32 %v516, %v519
  %vm521 = vweird.f32 %v472
  %vm522 = vweird.f32 %v516
  %vm523 = vmor %vm521, %vm522
  %v524 = vsel %vm523, %v516, %v520
  %v525 = vand.u32 2147483647, %v472
  %vm526 = vcmp.eq.f32.partialorder %v525, 8.507059e+37
  %v527 = vand.u32 %v472, 2147483648
  %v528 = vor.u32 1.1754944e-38, %v527
  %v529 = vsel %vm526, %v528, %v524
  %v530 = vmul.f32 1.0, %v529
  %v531 = vrcp.pop %v473
  %v532 = vmul.f32 %v473, %v531
  %v533 = vsub.f32 1.0, %v532
  %v534 = vmul.f32 %v531, %v533
  %v535 = vadd.f32 %v531, %v534
  %vm536 = vweird.f32 %v473
  %vm537 = vweird.f32 %v531
  %vm538 = vmor %vm536, %vm537
  %v539 = vsel %vm538, %v531, %v535
  %v540 = vand.u32 2147483647, %v473
  %vm541 = vcmp.eq.f32.partialorder %v540, 8.507059e+37
  %v542 = vand.u32 %v473, 2147483648
  %v543 = vor.u32 1.1754944e-38, %v542
  %v544 = vsel %vm541, %v543, %v539
  %v545 = vmul.f32 1.0, %v544
  %v546 = vrcp.pop %v474
  %v547 = vmul.f32 %v474, %v546
  %v548 = vsub.f32 1.0, %v547
  %v549 = vmul.f32 %v546, %v548
  %v550 = vadd.f32 %v546, %v549
  %vm551 = vweird.f32 %v474
  %vm552 = vweird.f32 %v546
  %vm553 = vmor %vm551, %vm552
  %v554 = vsel %vm553, %v546, %v550
  %v555 = vand.u32 2147483647, %v474
  %vm556 = vcmp.eq.f32.partialorder %v555, 8.507059e+37
  %v557 = vand.u32 %v474, 2147483648
  %v558 = vor.u32 1.1754944e-38, %v557
  %v559 = vsel %vm556, %v558, %v554
  %v560 = vmul.f32 1.0, %v559
  %v561 = vrcp.pop %v475
  %v562 = vmul.f32 %v475, %v561
  %v563 = vsub.f32 1.0, %v562
  %v564 = vmul.f32 %v561, %v563
  %v565 = vadd.f32 %v561, %v564
  %vm566 = vweird.f32 %v475
  %vm567 = vweird.f32 %v561
  %vm568 = vmor %vm566, %vm567
  %v569 = vsel %vm568, %v561, %v565
  %v570 = vand.u32 2147483647, %v475
  %vm571 = vcmp.eq.f32.partialorder %v570, 8.507059e+37
  %v572 = vand.u32 %v475, 2147483648
  %v573 = vor.u32 1.1754944e-38, %v572
  %v574 = vsel %vm571, %v573, %v569
  %v575 = vmul.f32 1.0, %v574
  %v576 = vrcp.pop %v476
  %v577 = vmul.f32 %v476, %v576
  %v578 = vsub.f32 1.0, %v577
  %v579 = vmul.f32 %v576, %v578
  %v580 = vadd.f32 %v576, %v579
  %vm581 = vweird.f32 %v476
  %vm582 = vweird.f32 %v576
  %vm583 = vmor %vm581, %vm582
  %v584 = vsel %vm583, %v576, %v580
  %v585 = vand.u32 2147483647, %v476
  %vm586 = vcmp.eq.f32.partialorder %v585, 8.507059e+37
  %v587 = vand.u32 %v476, 2147483648
  %v588 = vor.u32 1.1754944e-38, %v587
  %v589 = vsel %vm586, %v588, %v584
  %v590 = vmul.f32 1.0, %v589
  %v591 = vrcp.pop %v477
  %v592 = vmul.f32 %v477, %v591
  %v593 = vsub.f32 1.0, %v592
  %v594 = vmul.f32 %v591, %v593
  %v595 = vadd.f32 %v591, %v594
  %vm596 = vweird.f32 %v477
  %vm597 = vweird.f32 %v591
  %vm598 = vmor %vm596, %vm597
  %v599 = vsel %vm598, %v591, %v595
  %v600 = vand.u32 2147483647, %v477
  %vm601 = vcmp.eq.f32.partialorder %v600, 8.507059e+37
  %v602 = vand.u32 %v477, 2147483648
  %v603 = vor.u32 1.1754944e-38, %v602
  %v604 = vsel %vm601, %v603, %v599
  %v605 = vmul.f32 1.0, %v604
  %v606 = vrcp.pop %v478
  %v607 = vmul.f32 %v478, %v606
  %v608 = vsub.f32 1.0, %v607
  %v609 = vmul.f32 %v606, %v608
  %v610 = vadd.f32 %v606, %v609
  %vm611 = vweird.f32 %v478
  %vm612 = vweird.f32 %v606
  %vm613 = vmor %vm611, %vm612
  %v614 = vsel %vm613, %v606, %v610
  %v615 = vand.u32 2147483647, %v478
  %vm616 = vcmp.eq.f32.partialorder %v615, 8.507059e+37
  %v617 = vand.u32 %v478, 2147483648
  %v618 = vor.u32 1.1754944e-38, %v617
  %v619 = vsel %vm616, %v618, %v614
  %v620 = vmul.f32 1.0, %v619
  %v621 = vrcp.pop %v479
  %v622 = vmul.f32 %v479, %v621
  %v623 = vsub.f32 1.0, %v622
  %v624 = vmul.f32 %v621, %v623
  %v625 = vadd.f32 %v621, %v624
  %vm626 = vweird.f32 %v479
  %vm627 = vweird.f32 %v621
  %vm628 = vmor %vm626, %vm627
  %v629 = vsel %vm628, %v621, %v625
  %v630 = vand.u32 2147483647, %v479
  %vm631 = vcmp.eq.f32.partialorder %v630, 8.507059e+37
  %v632 = vand.u32 %v479, 2147483648
  %v633 = vor.u32 1.1754944e-38, %v632
  %v634 = vsel %vm631, %v633, %v629
  %v635 = vmul.f32 1.0, %v634
  %v636 = vrcp.pop %v480
  %v637 = vmul.f32 %v480, %v636
  %v638 = vsub.f32 1.0, %v637
  %v639 = vmul.f32 %v636, %v638
  %v640 = vadd.f32 %v636, %v639
  %vm641 = vweird.f32 %v480
  %vm642 = vweird.f32 %v636
  %vm643 = vmor %vm641, %vm642
  %v644 = vsel %vm643, %v636, %v640
  %v645 = vand.u32 2147483647, %v480
  %vm646 = vcmp.eq.f32.partialorder %v645, 8.507059e+37
  %v647 = vand.u32 %v480, 2147483648
  %v648 = vor.u32 1.1754944e-38, %v647
  %v649 = vsel %vm646, %v648, %v644
  %v650 = vmul.f32 1.0, %v649
  %v651 = vrcp.pop %v481
  %v652 = vmul.f32 %v481, %v651
  %v653 = vsub.f32 1.0, %v652
  %v654 = vmul.f32 %v651, %v653
  %v655 = vadd.f32 %v651, %v654
  %vm656 = vweird.f32 %v481
  %vm657 = vweird.f32 %v651
  %vm658 = vmor %vm656, %vm657
  %v659 = vsel %vm658, %v651, %v655
  %v660 = vand.u32 2147483647, %v481
  %vm661 = vcmp.eq.f32.partialorder %v660, 8.507059e+37
  %v662 = vand.u32 %v481, 2147483648
  %v663 = vor.u32 1.1754944e-38, %v662
  %v664 = vsel %vm661, %v663, %v659
  %v665 = vmul.f32 1.0, %v664
  %v666 = vrcp.pop %v482
  %v667 = vmul.f32 %v482, %v666
  %v668 = vsub.f32 1.0, %v667
  %v669 = vmul.f32 %v666, %v668
  %v670 = vadd.f32 %v666, %v669
  %vm671 = vweird.f32 %v482
  %vm672 = vweird.f32 %v666
  %vm673 = vmor %vm671, %vm672
  %v674 = vsel %vm673, %v666, %v670
  %v675 = vand.u32 2147483647, %v482
  %vm676 = vcmp.eq.f32.partialorder %v675, 8.507059e+37
  %v677 = vand.u32 %v482, 2147483648
  %v678 = vor.u32 1.1754944e-38, %v677
  %v679 = vsel %vm676, %v678, %v674
  %v680 = vmul.f32 1.0, %v679
  %v681 = vrcp.pop %v483
  %v682 = vmul.f32 %v483, %v681
  %v683 = vsub.f32 1.0, %v682
  %v684 = vmul.f32 %v681, %v683
  %v685 = vadd.f32 %v681, %v684
  %vm686 = vweird.f32 %v483
  %vm687 = vweird.f32 %v681
  %vm688 = vmor %vm686, %vm687
  %v689 = vsel %vm688, %v681, %v685
  %v690 = vand.u32 2147483647, %v483
  %vm691 = vcmp.eq.f32.partialorder %v690, 8.507059e+37
  %v692 = vand.u32 %v483, 2147483648
  %v693 = vor.u32 1.1754944e-38, %v692
  %v694 = vsel %vm691, %v693, %v689
  %v695 = vmul.f32 1.0, %v694
  %v696 = vrcp.pop %v484
  %v697 = vmul.f32 %v484, %v696
  %v698 = vsub.f32 1.0, %v697
  %v699 = vmul.f32 %v696, %v698
  %v700 = vadd.f32 %v696, %v699
  %vm701 = vweird.f32 %v484
  %vm702 = vweird.f32 %v696
  %vm703 = vmor %vm701, %vm702
  %v704 = vsel %vm703, %v696, %v700
  %v705 = vand.u32 2147483647, %v484
  %vm706 = vcmp.eq.f32.partialorder %v705, 8.507059e+37
  %v707 = vand.u32 %v484, 2147483648
  %v708 = vor.u32 1.1754944e-38, %v707
  %v709 = vsel %vm706, %v708, %v704
  %v710 = vmul.f32 1.0, %v709
  %v711 = vrcp.pop %v485
  %v712 = vmul.f32 %v485, %v711
  %v713 = vsub.f32 1.0, %v712
  %v714 = vmul.f32 %v711, %v713
  %v715 = vadd.f32 %v711, %v714
  %vm716 = vweird.f32 %v485
  %vm717 = vweird.f32 %v711
  %vm718 = vmor %vm716, %vm717
  %v719 = vsel %vm718, %v711, %v715
  %v720 = vand.u32 2147483647, %v485
  %vm721 = vcmp.eq.f32.partialorder %v720, 8.507059e+37
  %v722 = vand.u32 %v485, 2147483648
  %v723 = vor.u32 1.1754944e-38, %v722
  %v724 = vsel %vm721, %v723, %v719
  %v725 = vmul.f32 1.0, %v724
  %742 = vset.pattern.permute.xlu0 0
  %743 = vperm.xlu0 %742, %v500
  %v744 = vpop.permute.xlu0 %743
  %745 = vset.pattern.permute.xlu0 0
  %746 = vperm.xlu0 %745, %v515
  %v747 = vpop.permute.xlu0 %746
  %748 = vset.pattern.permute.xlu0 0
  %749 = vperm.xlu0 %748, %v530
  %v750 = vpop.permute.xlu0 %749
  %751 = vset.pattern.permute.xlu0 0
  %752 = vperm.xlu0 %751, %v545
  %v753 = vpop.permute.xlu0 %752
  %754 = vset.pattern.permute.xlu0 0
  %755 = vperm.xlu0 %754, %v560
  %v756 = vpop.permute.xlu0 %755
  %757 = vset.pattern.permute.xlu0 0
  %758 = vperm.xlu0 %757, %v575
  %v759 = vpop.permute.xlu0 %758
  %760 = vset.pattern.permute.xlu0 0
  %761 = vperm.xlu0 %760, %v590
  %v762 = vpop.permute.xlu0 %761
  %763 = vset.pattern.permute.xlu0 0
  %764 = vperm.xlu0 %763, %v605
  %v765 = vpop.permute.xlu0 %764
  %766 = vset.pattern.permute.xlu0 0
  %767 = vperm.xlu0 %766, %v620
  %v768 = vpop.permute.xlu0 %767
  %769 = vset.pattern.permute.xlu0 0
  %770 = vperm.xlu0 %769, %v635
  %v771 = vpop.permute.xlu0 %770
  %772 = vset.pattern.permute.xlu0 0
  %773 = vperm.xlu0 %772, %v650
  %v774 = vpop.permute.xlu0 %773
  %775 = vset.pattern.permute.xlu0 0
  %776 = vperm.xlu0 %775, %v665
  %v777 = vpop.permute.xlu0 %776
  %778 = vset.pattern.permute.xlu0 0
  %779 = vperm.xlu0 %778, %v680
  %v780 = vpop.permute.xlu0 %779
  %781 = vset.pattern.permute.xlu0 0
  %782 = vperm.xlu0 %781, %v695
  %v783 = vpop.permute.xlu0 %782
  %784 = vset.pattern.permute.xlu0 0
  %785 = vperm.xlu0 %784, %v710
  %v786 = vpop.permute.xlu0 %785
  %787 = vset.pattern.permute.xlu0 0
  %788 = vperm.xlu0 %787, %v725
  %v789 = vpop.permute.xlu0 %788
  %v790 = vlaneseq
  %v791 = vand.u32 %v790, 127
  %v792 = vperm.slane %v744, %v791
  %v793 = vadd.s32 %v791, 4294967288
  %v794 = vperm.slane %v747, %v793
  %vm795 = vcmask 130112
  %v796 = vsel %vm795, %v794, %v792
  %v797 = vperm.slane %v750, %v791
  %v798 = vperm.slane %v753, %v793
  %v799 = vsel %vm795, %v798, %v797
  %v800 = vperm.slane %v756, %v791
  %v801 = vperm.slane %v759, %v793
  %v802 = vsel %vm795, %v801, %v800
  %v803 = vperm.slane %v762, %v791
  %v804 = vperm.slane %v765, %v793
  %v805 = vsel %vm795, %v804, %v803
  %v806 = vperm.slane %v768, %v791
  %v807 = vperm.slane %v771, %v793
  %v808 = vsel %vm795, %v807, %v806
  %v809 = vperm.slane %v774, %v791
  %v810 = vperm.slane %v777, %v793
  %v811 = vsel %vm795, %v810, %v809
  %v812 = vperm.slane %v780, %v791
  %v813 = vperm.slane %v783, %v793
  %v814 = vsel %vm795, %v813, %v812
  %v815 = vperm.slane %v786, %v791
  %v816 = vperm.slane %v789, %v793
  %v817 = vsel %vm795, %v816, %v815
  %vm818 = vcmask 1041409
  %v819 = vsel %vm818, %v799, %v796
  %vm820 = vcmask 1042434
  %v821 = vsel %vm820, %v802, %v819
  %vm822 = vcmask 1043459
  %v823 = vsel %vm822, %v805, %v821
  %vm824 = vcmask 1044484
  %v825 = vsel %vm824, %v808, %v823
  %vm826 = vcmask 1045509
  %v827 = vsel %vm826, %v811, %v825
  %vm828 = vcmask 1046534
  %v829 = vsel %vm828, %v814, %v827
  %vm830 = vcmask 1047559
  %v831 = vsel %vm830, %v817, %v829
  %vm833 = vcmask 130048
  %834 = vst.msk [vmem:[%s4] sm:$0xff] %vm833, %v831
  // Predicated region
  $region18: #{unsup_emb_forward.3} parent=0 // pred_check
    _
  $region19: #{unsup_emb_forward.3} parent=0 // pred_check_branch
    %836 = sbr.rel (0) target = $region21
  $region20: #{unsup_emb_forward.3} parent=0 // pred_region
    _
  $region21: #{unsup_emb_forward.3} parent=0 // pred_fallthru
    _
  // Predicated region
  $region22: #{unsup_emb_forward.3} parent=0 // pred_check
    _
  $region23: #{unsup_emb_forward.3} parent=0 // pred_check_branch
    %838 = sbr.rel (0) target = $region25
  $region24: #{unsup_emb_forward.3} parent=0 // pred_region
    _
  $region25: #{unsup_emb_forward.3} parent=0 // pred_fallthru
    _

// kernel: unsup_emb_forward.2
$region0: #{unsup_emb_forward.2}
  #allocation0 [shape = 'u32[]', space=smem, size = 0x4, offset = 0x4, fixed_abs, tag = 'smem constant byte address 0x4 - core index']
  #allocation1 [shape = 'u32[72,128]{1,0:T(1,128)}', space=vmem, size = 0x9000, scoped, tag = 'internal scratch']
  #allocation2 [shape = 'f32[2,32]{1,0:T(2,128)}', space=vmem, size = 0x400, scoped, tag = 'scratch operand']
  #allocation3 [shape = 'f32[2,32]{1,0:T(2,128)}', space=vmem, size = 0x400, scoped, tag = 'scratch operand']
  %s0 = inlined_call_operand.vmem [shape: bf16[8,2,128], index: 0, kind: input, shape index: {}]
  %s1 = inlined_call_operand.vmem [shape: bf16[32,128], index: 1, kind: input, shape index: {}]
  %s2 = inlined_call_operand.vmem [shape: bf16[8,2,32], index: 2, kind: output, shape index: {}]
  %s3 = sld [smem:[#allocation0]]
  $region22: #{unsup_emb_forward.2} parent=0
    _
  %s5 = ssub.s32 1, %s3
  %s6 = scalar_select 0, %s5, %s3
  // Predicated region
  $region2: #{unsup_emb_forward.2} parent=0 // pred_check
    _
  $region3: #{unsup_emb_forward.2} parent=0 // pred_check_branch
    %8 = sbr.rel (0) target = $region5
  $region4: #{unsup_emb_forward.2} parent=0 // pred_region
    _
  $region5: #{unsup_emb_forward.2} parent=0 // pred_fallthru
    _
  // Predicated region
  $region6: #{unsup_emb_forward.2} parent=0 // pred_check
    _
  $region7: #{unsup_emb_forward.2} parent=0 // pred_check_branch
    %10 = sbr.rel (0) target = $region9
  $region8: #{unsup_emb_forward.2} parent=0 // pred_region
    _
  $region9: #{unsup_emb_forward.2} parent=0 // pred_fallthru
    _
  %p12 = scmp.eq.s32.totalorder 0, 0
  // Predicated region
  $region10: #{unsup_emb_forward.2} parent=0 // pred_check
    %p13 = pneg %p12
  $region11: #{unsup_emb_forward.2} parent=0 // pred_check_branch
    %15 = sbr.rel (%p13) target = $region13
  $region12: #{unsup_emb_forward.2} parent=0 // pred_region
    %vm16 = vcmask 254976
    %17 = vst.msk [vmem:[#allocation2] sm:$0x3] %vm16, 0.0
    %18 = vst.msk [vmem:[#allocation3] sm:$0x3] %vm16, 0.0
  $region13: #{unsup_emb_forward.2} parent=0 // pred_fallthru
    _
  %v19 = vld [vmem:[#allocation2] sm:$0x3]
  %v20 = vld [vmem:[#allocation3] sm:$0x3]
  %v21 = vld [vmem:[%s0] sm:$0x1]
  %v22 = vunpack.c.l.bf16 %v21
  %v23 = vpack.c.bf16 %v19, %v19
  %v24 = vld [vmem:[%s1] sm:$0xf]
  %v25 = vld [vmem:[%s1 + $0x4] sm:$0xf]
  %v26 = vld [vmem:[%s1 + $0x8] sm:$0xf]
  %v27 = vld [vmem:[%s1 + $0xc] sm:$0xf]
  %v32 = vunpack.c.l.b16 %v24
  %v33 = vunpack.c.l.b16 %v25
  %v34 = vunpack.c.l.b16 %v26
  %v35 = vunpack.c.l.b16 %v27
  %v36 = vpack.c.b16 %v33, %v32
  %v37 = vpack.c.b16 %v35, %v34
  %vm40 = vcmask 261120
  %v42 = vsel %vm40, %v23, 0
  %44 = vmatpush.bf16.msra.mxu0 0
  %45 = vmatpush.bf16.msra.mxu0 0
  %46 = vmatpush.bf16.msra.mxu0 0
  %47 = vmatpush.bf16.msra.mxu0 0
  %48 = vmatpush.bf16.msra.mxu0 0
  %49 = vmatpush.bf16.msra.mxu0 0
  %50 = vmatpush.bf16.msra.mxu0 %v37
  %51 = vmatpush.bf16.msra.mxu0 %v36
  %52 = vmatmul.bf16.gmra.mxu0 %v42
  %v53 = vpop.f32.mrf.mxu0
  %v54 = vadd.f32 0.0, %v53
  %v55 = vpop.f32.mrf.mxu0
  %56 = vdwg.mxu0
  %v57 = vadd.f32 %v22, %v54
  %v58 = vxor.u32 %v57, 2147483648
  %v59 = vmul.f32 %v58, 1.442695
  %v60 = vpow.pop %v59
  %v61 = vadd.f32 %v60, 1.0
  %v62 = vrcp.pop %v61
  %v63 = vmul.f32 %v61, %v62
  %v64 = vsub.f32 1.0, %v63
  %v65 = vmul.f32 %v62, %v64
  %v66 = vadd.f32 %v62, %v65
  %vm67 = vweird.f32 %v61
  %vm68 = vweird.f32 %v62
  %vm69 = vmor %vm67, %vm68
  %v70 = vsel %vm69, %v62, %v66
  %v71 = vand.u32 2147483647, %v61
  %vm72 = vcmp.eq.f32.partialorder %v71, 8.507059e+37
  %v73 = vand.u32 %v61, 2147483648
  %v74 = vor.u32 1.1754944e-38, %v73
  %v75 = vsel %vm72, %v74, %v70
  %v76 = vmul.f32 1.0, %v75
  %v77 = vtanh.pop %v57
  %79 = vrot.lane.b32.xlu0 %v20, 32
  %v80 = vpop.permute.xlu0 %79
  %v82 = vmul.f32 %v76, %v80
  %84 = vrot.lane.b32.xlu0 %v77, 64
  %v85 = vpop.permute.xlu0 %84
  %v87 = vmul.f32 %v76, %v85
  %89 = vrot.lane.b32.xlu0 %v87, 32
  %v90 = vpop.permute.xlu0 %89
  %v92 = vadd.f32 %v82, %v90
  %v93 = vtanh.pop %v92
  %95 = vrot.lane.b32.xlu0 %v93, 64
  %v96 = vpop.permute.xlu0 %95
  %v98 = vmul.f32 %v76, %v96
  %v99 = vpack.c.bf16 %v98, %v98
  %v101 = vrot.slane %v99, 3
  %vm102 = vcmask 1040384
  %v105 = vsel %vm102, %v99, %v101
  %107 = vrot.lane.b32.xlu0 %v105, 32
  %v108 = vpop.permute.xlu0 %107
  %vm110 = vcmask 253952
  %111 = vst.msk [vmem:[%s2] sm:$0x1] %vm110, %v108
  %s112 = scalar_lea.vmem %s0, 1
  %v113 = vld [vmem:[%s112] sm:$0x1]
  %v114 = vunpack.c.l.bf16 %v113
  %v115 = vld [vmem:[%s1] sm:$0xf]
  %v116 = vld [vmem:[%s1 + $0x4] sm:$0xf]
  %v117 = vld [vmem:[%s1 + $0x8] sm:$0xf]
  %v118 = vld [vmem:[%s1 + $0xc] sm:$0xf]
  %v119 = vunpack.c.l.b16 %v99
  %v120 = vpack.c.b16 %v119, %v119
  %121 = vrot.lane.b32.xlu0 %v120, 32
  %v122 = vpop.permute.xlu0 %121
  %v127 = vunpack.c.l.b16 %v115
  %v128 = vunpack.c.l.b16 %v116
  %v129 = vunpack.c.l.b16 %v117
  %v130 = vunpack.c.l.b16 %v118
  %v131 = vpack.c.b16 %v128, %v127
  %v132 = vpack.c.b16 %v130, %v129
  %v136 = vsel %vm40, %v122, 0
  %138 = vmatpush.bf16.msra.mxu0 0
  %139 = vmatpush.bf16.msra.mxu0 0
  %140 = vmatpush.bf16.msra.mxu0 0
  %141 = vmatpush.bf16.msra.mxu0 0
  %142 = vmatpush.bf16.msra.mxu0 0
  %143 = vmatpush.bf16.msra.mxu0 0
  %144 = vmatpush.bf16.msra.mxu0 %v132
  %145 = vmatpush.bf16.msra.mxu0 %v131
  %146 = vmatmul.bf16.gmra.mxu0 %v136
  %v147 = vpop.f32.mrf.mxu0
  %v148 = vadd.f32 0.0, %v147
  %v149 = vpop.f32.mrf.mxu0
  %150 = vdwg.mxu0
  %v151 = vadd.f32 %v114, %v148
  %v152 = vxor.u32 %v151, 2147483648
  %v153 = vmul.f32 %v152, 1.442695
  %v154 = vpow.pop %v153
  %v155 = vadd.f32 %v154, 1.0
  %v156 = vrcp.pop %v155
  %v157 = vmul.f32 %v155, %v156
  %v158 = vsub.f32 1.0, %v157
  %v159 = vmul.f32 %v156, %v158
  %v160 = vadd.f32 %v156, %v159
  %vm161 = vweird.f32 %v155
  %vm162 = vweird.f32 %v156
  %vm163 = vmor %vm161, %vm162
  %v164 = vsel %vm163, %v156, %v160
  %v165 = vand.u32 2147483647, %v155
  %vm166 = vcmp.eq.f32.partialorder %v165, 8.507059e+37
  %v167 = vand.u32 %v155, 2147483648
  %v168 = vor.u32 1.1754944e-38, %v167
  %v169 = vsel %vm166, %v168, %v164
  %v170 = vmul.f32 1.0, %v169
  %v171 = vtanh.pop %v151
  %v172 = vmul.f32 %v170, %v92
  %174 = vrot.lane.b32.xlu0 %v171, 64
  %v175 = vpop.permute.xlu0 %174
  %v177 = vmul.f32 %v170, %v175
  %179 = vrot.lane.b32.xlu0 %v177, 32
  %v180 = vpop.permute.xlu0 %179
  %v182 = vadd.f32 %v172, %v180
  %v183 = vtanh.pop %v182
  %185 = vrot.lane.b32.xlu0 %v183, 64
  %v186 = vpop.permute.xlu0 %185
  %v188 = vmul.f32 %v170, %v186
  %v189 = vpack.c.bf16 %v188, %v188
  %v191 = vrot.slane %v189, 3
  %v194 = vsel %vm102, %v189, %v191
  %196 = vrot.lane.b32.xlu0 %v194, 32
  %v197 = vpop.permute.xlu0 %196
  %s199 = scalar_lea.vmem %s2, 1
  %200 = vst.msk [vmem:[%s199] sm:$0x1] %vm110, %v197
  %s201 = scalar_lea.vmem %s0, 2
  %v202 = vld [vmem:[%s201] sm:$0x1]
  %v203 = vunpack.c.l.bf16 %v202
  %v204 = vld [vmem:[%s1] sm:$0xf]
  %v205 = vld [vmem:[%s1 + $0x4] sm:$0xf]
  %v206 = vld [vmem:[%s1 + $0x8] sm:$0xf]
  %v207 = vld [vmem:[%s1 + $0xc] sm:$0xf]
  %v208 = vunpack.c.l.b16 %v189
  %v209 = vpack.c.b16 %v208, %v208
  %210 = vrot.lane.b32.xlu0 %v209, 32
  %v211 = vpop.permute.xlu0 %210
  %v216 = vunpack.c.l.b16 %v204
  %v217 = vunpack.c.l.b16 %v205
  %v218 = vunpack.c.l.b16 %v206
  %v219 = vunpack.c.l.b16 %v207
  %v220 = vpack.c.b16 %v217, %v216
  %v221 = vpack.c.b16 %v219, %v218
  %v225 = vsel %vm40, %v211, 0
  %227 = vmatpush.bf16.msra.mxu0 0
  %228 = vmatpush.bf16.msra.mxu0 0
  %229 = vmatpush.bf16.msra.mxu0 0
  %230 = vmatpush.bf16.msra.mxu0 0
  %231 = vmatpush.bf16.msra.mxu0 0
  %232 = vmatpush.bf16.msra.mxu0 0
  %233 = vmatpush.bf16.msra.mxu0 %v221
  %234 = vmatpush.bf16.msra.mxu0 %v220
  %235 = vmatmul.bf16.gmra.mxu0 %v225
  %v236 = vpop.f32.mrf.mxu0
  %v237 = vadd.f32 0.0, %v236
  %v238 = vpop.f32.mrf.mxu0
  %239 = vdwg.mxu0
  %v240 = vadd.f32 %v203, %v237
  %v241 = vxor.u32 %v240, 2147483648
  %v242 = vmul.f32 %v241, 1.442695
  %v243 = vpow.pop %v242
  %v244 = vadd.f32 %v243, 1.0
  %v245 = vrcp.pop %v244
  %v246 = vmul.f32 %v244, %v245
  %v247 = vsub.f32 1.0, %v246
  %v248 = vmul.f32 %v245, %v247
  %v249 = vadd.f32 %v245, %v248
  %vm250 = vweird.f32 %v244
  %vm251 = vweird.f32 %v245
  %vm252 = vmor %vm250, %vm251
  %v253 = vsel %vm252, %v245, %v249
  %v254 = vand.u32 2147483647, %v244
  %vm255 = vcmp.eq.f32.partialorder %v254, 8.507059e+37
  %v256 = vand.u32 %v244, 2147483648
  %v257 = vor.u32 1.1754944e-38, %v256
  %v258 = vsel %vm255, %v257, %v253
  %v259 = vmul.f32 1.0, %v258
  %v260 = vtanh.pop %v240
  %v261 = vmul.f32 %v259, %v182
  %263 = vrot.lane.b32.xlu0 %v260, 64
  %v264 = vpop.permute.xlu0 %263
  %v266 = vmul.f32 %v259, %v264
  %268 = vrot.lane.b32.xlu0 %v266, 32
  %v269 = vpop.permute.xlu0 %268
  %v271 = vadd.f32 %v261, %v269
  %v272 = vtanh.pop %v271
  %274 = vrot.lane.b32.xlu0 %v272, 64
  %v275 = vpop.permute.xlu0 %274
  %v277 = vmul.f32 %v259, %v275
  %v278 = vpack.c.bf16 %v277, %v277
  %v280 = vrot.slane %v278, 3
  %v283 = vsel %vm102, %v278, %v280
  %285 = vrot.lane.b32.xlu0 %v283, 32
  %v286 = vpop.permute.xlu0 %285
  %s288 = scalar_lea.vmem %s2, 2
  %289 = vst.msk [vmem:[%s288] sm:$0x1] %vm110, %v286
  %s290 = scalar_lea.vmem %s0, 3
  %v291 = vld [vmem:[%s290] sm:$0x1]
  %v292 = vunpack.c.l.bf16 %v291
  %v293 = vld [vmem:[%s1] sm:$0xf]
  %v294 = vld [vmem:[%s1 + $0x4] sm:$0xf]
  %v295 = vld [vmem:[%s1 + $0x8] sm:$0xf]
  %v296 = vld [vmem:[%s1 + $0xc] sm:$0xf]
  %v297 = vunpack.c.l.b16 %v278
  %v298 = vpack.c.b16 %v297, %v297
  %299 = vrot.lane.b32.xlu0 %v298, 32
  %v300 = vpop.permute.xlu0 %299
  %v305 = vunpack.c.l.b16 %v293
  %v306 = vunpack.c.l.b16 %v294
  %v307 = vunpack.c.l.b16 %v295
  %v308 = vunpack.c.l.b16 %v296
  %v309 = vpack.c.b16 %v306, %v305
  %v310 = vpack.c.b16 %v308, %v307
  %v314 = vsel %vm40, %v300, 0
  %316 = vmatpush.bf16.msra.mxu0 0
  %317 = vmatpush.bf16.msra.mxu0 0
  %318 = vmatpush.bf16.msra.mxu0 0
  %319 = vmatpush.bf16.msra.mxu0 0
  %320 = vmatpush.bf16.msra.mxu0 0
  %321 = vmatpush.bf16.msra.mxu0 0
  %322 = vmatpush.bf16.msra.mxu0 %v310
  %323 = vmatpush.bf16.msra.mxu0 %v309
  %324 = vmatmul.bf16.gmra.mxu0 %v314
  %v325 = vpop.f32.mrf.mxu0
  %v326 = vadd.f32 0.0, %v325
  %v327 = vpop.f32.mrf.mxu0
  %328 = vdwg.mxu0
  %v329 = vadd.f32 %v292, %v326
  %v330 = vxor.u32 %v329, 2147483648
  %v331 = vmul.f32 %v330, 1.442695
  %v332 = vpow.pop %v331
  %v333 = vadd.f32 %v332, 1.0
  %v334 = vrcp.pop %v333
  %v335 = vmul.f32 %v333, %v334
  %v336 = vsub.f32 1.0, %v335
  %v337 = vmul.f32 %v334, %v336
  %v338 = vadd.f32 %v334, %v337
  %vm339 = vweird.f32 %v333
  %vm340 = vweird.f32 %v334
  %vm341 = vmor %vm339, %vm340
  %v342 = vsel %vm341, %v334, %v338
  %v343 = vand.u32 2147483647, %v333
  %vm344 = vcmp.eq.f32.partialorder %v343, 8.507059e+37
  %v345 = vand.u32 %v333, 2147483648
  %v346 = vor.u32 1.1754944e-38, %v345
  %v347 = vsel %vm344, %v346, %v342
  %v348 = vmul.f32 1.0, %v347
  %v349 = vtanh.pop %v329
  %v350 = vmul.f32 %v348, %v271
  %352 = vrot.lane.b32.xlu0 %v349, 64
  %v353 = vpop.permute.xlu0 %352
  %v355 = vmul.f32 %v348, %v353
  %357 = vrot.lane.b32.xlu0 %v355, 32
  %v358 = vpop.permute.xlu0 %357
  %v360 = vadd.f32 %v350, %v358
  %v361 = vtanh.pop %v360
  %363 = vrot.lane.b32.xlu0 %v361, 64
  %v364 = vpop.permute.xlu0 %363
  %v366 = vmul.f32 %v348, %v364
  %v367 = vpack.c.bf16 %v366, %v366
  %v369 = vrot.slane %v367, 3
  %v372 = vsel %vm102, %v367, %v369
  %374 = vrot.lane.b32.xlu0 %v372, 32
  %v375 = vpop.permute.xlu0 %374
  %s377 = scalar_lea.vmem %s2, 3
  %378 = vst.msk [vmem:[%s377] sm:$0x1] %vm110, %v375
  %s379 = scalar_lea.vmem %s0, 4
  %v380 = vld [vmem:[%s379] sm:$0x1]
  %v381 = vunpack.c.l.bf16 %v380
  %v382 = vld [vmem:[%s1] sm:$0xf]
  %v383 = vld [vmem:[%s1 + $0x4] sm:$0xf]
  %v384 = vld [vmem:[%s1 + $0x8] sm:$0xf]
  %v385 = vld [vmem:[%s1 + $0xc] sm:$0xf]
  %v386 = vunpack.c.l.b16 %v367
  %v387 = vpack.c.b16 %v386, %v386
  %388 = vrot.lane.b32.xlu0 %v387, 32
  %v389 = vpop.permute.xlu0 %388
  %v394 = vunpack.c.l.b16 %v382
  %v395 = vunpack.c.l.b16 %v383
  %v396 = vunpack.c.l.b16 %v384
  %v397 = vunpack.c.l.b16 %v385
  %v398 = vpack.c.b16 %v395, %v394
  %v399 = vpack.c.b16 %v397, %v396
  %v403 = vsel %vm40, %v389, 0
  %405 = vmatpush.bf16.msra.mxu0 0
  %406 = vmatpush.bf16.msra.mxu0 0
  %407 = vmatpush.bf16.msra.mxu0 0
  %408 = vmatpush.bf16.msra.mxu0 0
  %409 = vmatpush.bf16.msra.mxu0 0
  %410 = vmatpush.bf16.msra.mxu0 0
  %411 = vmatpush.bf16.msra.mxu0 %v399
  %412 = vmatpush.bf16.msra.mxu0 %v398
  %413 = vmatmul.bf16.gmra.mxu0 %v403
  %v414 = vpop.f32.mrf.mxu0
  %v415 = vadd.f32 0.0, %v414
  %v416 = vpop.f32.mrf.mxu0
  %417 = vdwg.mxu0
  %v418 = vadd.f32 %v381, %v415
  %v419 = vxor.u32 %v418, 2147483648
  %v420 = vmul.f32 %v419, 1.442695
  %v421 = vpow.pop %v420
  %v422 = vadd.f32 %v421, 1.0
  %v423 = vrcp.pop %v422
  %v424 = vmul.f32 %v422, %v423
  %v425 = vsub.f32 1.0, %v424
  %v426 = vmul.f32 %v423, %v425
  %v427 = vadd.f32 %v423, %v426
  %vm428 = vweird.f32 %v422
  %vm429 = vweird.f32 %v423
  %vm430 = vmor %vm428, %vm429
  %v431 = vsel %vm430, %v423, %v427
  %v432 = vand.u32 2147483647, %v422
  %vm433 = vcmp.eq.f32.partialorder %v432, 8.507059e+37
  %v434 = vand.u32 %v422, 2147483648
  %v435 = vor.u32 1.1754944e-38, %v434
  %v436 = vsel %vm433, %v435, %v431
  %v437 = vmul.f32 1.0, %v436
  %v438 = vtanh.pop %v418
  %v439 = vmul.f32 %v437, %v360
  %441 = vrot.lane.b32.xlu0 %v438, 64
  %v442 = vpop.permute.xlu0 %441
  %v444 = vmul.f32 %v437, %v442
  %446 = vrot.lane.b32.xlu0 %v444, 32
  %v447 = vpop.permute.xlu0 %446
  %v449 = vadd.f32 %v439, %v447
  %v450 = vtanh.pop %v449
  %452 = vrot.lane.b32.xlu0 %v450, 64
  %v453 = vpop.permute.xlu0 %452
  %v455 = vmul.f32 %v437, %v453
  %v456 = vpack.c.bf16 %v455, %v455
  %v458 = vrot.slane %v456, 3
  %v461 = vsel %vm102, %v456, %v458
  %463 = vrot.lane.b32.xlu0 %v461, 32
  %v464 = vpop.permute.xlu0 %463
  %s466 = scalar_lea.vmem %s2, 4
  %467 = vst.msk [vmem:[%s466] sm:$0x1] %vm110, %v464
  %s468 = scalar_lea.vmem %s0, 5
  %v469 = vld [vmem:[%s468] sm:$0x1]
  %v470 = vunpack.c.l.bf16 %v469
  %v471 = vld [vmem:[%s1] sm:$0xf]
  %v472 = vld [vmem:[%s1 + $0x4] sm:$0xf]
  %v473 = vld [vmem:[%s1 + $0x8] sm:$0xf]
  %v474 = vld [vmem:[%s1 + $0xc] sm:$0xf]
  %v475 = vunpack.c.l.b16 %v456
  %v476 = vpack.c.b16 %v475, %v475
  %477 = vrot.lane.b32.xlu0 %v476, 32
  %v478 = vpop.permute.xlu0 %477
  %v483 = vunpack.c.l.b16 %v471
  %v484 = vunpack.c.l.b16 %v472
  %v485 = vunpack.c.l.b16 %v473
  %v486 = vunpack.c.l.b16 %v474
  %v487 = vpack.c.b16 %v484, %v483
  %v488 = vpack.c.b16 %v486, %v485
  %v492 = vsel %vm40, %v478, 0
  %494 = vmatpush.bf16.msra.mxu0 0
  %495 = vmatpush.bf16.msra.mxu0 0
  %496 = vmatpush.bf16.msra.mxu0 0
  %497 = vmatpush.bf16.msra.mxu0 0
  %498 = vmatpush.bf16.msra.mxu0 0
  %499 = vmatpush.bf16.msra.mxu0 0
  %500 = vmatpush.bf16.msra.mxu0 %v488
  %501 = vmatpush.bf16.msra.mxu0 %v487
  %502 = vmatmul.bf16.gmra.mxu0 %v492
  %v503 = vpop.f32.mrf.mxu0
  %v504 = vadd.f32 0.0, %v503
  %v505 = vpop.f32.mrf.mxu0
  %506 = vdwg.mxu0
  %v507 = vadd.f32 %v470, %v504
  %v508 = vxor.u32 %v507, 2147483648
  %v509 = vmul.f32 %v508, 1.442695
  %v510 = vpow.pop %v509
  %v511 = vadd.f32 %v510, 1.0
  %v512 = vrcp.pop %v511
  %v513 = vmul.f32 %v511, %v512
  %v514 = vsub.f32 1.0, %v513
  %v515 = vmul.f32 %v512, %v514
  %v516 = vadd.f32 %v512, %v515
  %vm517 = vweird.f32 %v511
  %vm518 = vweird.f32 %v512
  %vm519 = vmor %vm517, %vm518
  %v520 = vsel %vm519, %v512, %v516
  %v521 = vand.u32 2147483647, %v511
  %vm522 = vcmp.eq.f32.partialorder %v521, 8.507059e+37
  %v523 = vand.u32 %v511, 2147483648
  %v524 = vor.u32 1.1754944e-38, %v523
  %v525 = vsel %vm522, %v524, %v520
  %v526 = vmul.f32 1.0, %v525
  %v527 = vtanh.pop %v507
  %v528 = vmul.f32 %v526, %v449
  %530 = vrot.lane.b32.xlu0 %v527, 64
  %v531 = vpop.permute.xlu0 %530
  %v533 = vmul.f32 %v526, %v531
  %535 = vrot.lane.b32.xlu0 %v533, 32
  %v536 = vpop.permute.xlu0 %535
  %v538 = vadd.f32 %v528, %v536
  %v539 = vtanh.pop %v538
  %541 = vrot.lane.b32.xlu0 %v539, 64
  %v542 = vpop.permute.xlu0 %541
  %v544 = vmul.f32 %v526, %v542
  %v545 = vpack.c.bf16 %v544, %v544
  %v547 = vrot.slane %v545, 3
  %v550 = vsel %vm102, %v545, %v547
  %552 = vrot.lane.b32.xlu0 %v550, 32
  %v553 = vpop.permute.xlu0 %552
  %s555 = scalar_lea.vmem %s2, 5
  %556 = vst.msk [vmem:[%s555] sm:$0x1] %vm110, %v553
  %s557 = scalar_lea.vmem %s0, 6
  %v558 = vld [vmem:[%s557] sm:$0x1]
  %v559 = vunpack.c.l.bf16 %v558
  %v560 = vld [vmem:[%s1] sm:$0xf]
  %v561 = vld [vmem:[%s1 + $0x4] sm:$0xf]
  %v562 = vld [vmem:[%s1 + $0x8] sm:$0xf]
  %v563 = vld [vmem:[%s1 + $0xc] sm:$0xf]
  %v564 = vunpack.c.l.b16 %v545
  %v565 = vpack.c.b16 %v564, %v564
  %566 = vrot.lane.b32.xlu0 %v565, 32
  %v567 = vpop.permute.xlu0 %566
  %v572 = vunpack.c.l.b16 %v560
  %v573 = vunpack.c.l.b16 %v561
  %v574 = vunpack.c.l.b16 %v562
  %v575 = vunpack.c.l.b16 %v563
  %v576 = vpack.c.b16 %v573, %v572
  %v577 = vpack.c.b16 %v575, %v574
  %v581 = vsel %vm40, %v567, 0
  %583 = vmatpush.bf16.msra.mxu0 0
  %584 = vmatpush.bf16.msra.mxu0 0
  %585 = vmatpush.bf16.msra.mxu0 0
  %586 = vmatpush.bf16.msra.mxu0 0
  %587 = vmatpush.bf16.msra.mxu0 0
  %588 = vmatpush.bf16.msra.mxu0 0
  %589 = vmatpush.bf16.msra.mxu0 %v577
  %590 = vmatpush.bf16.msra.mxu0 %v576
  %591 = vmatmul.bf16.gmra.mxu0 %v581
  %v592 = vpop.f32.mrf.mxu0
  %v593 = vadd.f32 0.0, %v592
  %v594 = vpop.f32.mrf.mxu0
  %595 = vdwg.mxu0
  %v596 = vadd.f32 %v559, %v593
  %v597 = vxor.u32 %v596, 2147483648
  %v598 = vmul.f32 %v597, 1.442695
  %v599 = vpow.pop %v598
  %v600 = vadd.f32 %v599, 1.0
  %v601 = vrcp.pop %v600
  %v602 = vmul.f32 %v600, %v601
  %v603 = vsub.f32 1.0, %v602
  %v604 = vmul.f32 %v601, %v603
  %v605 = vadd.f32 %v601, %v604
  %vm606 = vweird.f32 %v600
  %vm607 = vweird.f32 %v601
  %vm608 = vmor %vm606, %vm607
  %v609 = vsel %vm608, %v601, %v605
  %v610 = vand.u32 2147483647, %v600
  %vm611 = vcmp.eq.f32.partialorder %v610, 8.507059e+37
  %v612 = vand.u32 %v600, 2147483648
  %v613 = vor.u32 1.1754944e-38, %v612
  %v614 = vsel %vm611, %v613, %v609
  %v615 = vmul.f32 1.0, %v614
  %v616 = vtanh.pop %v596
  %v617 = vmul.f32 %v615, %v538
  %619 = vrot.lane.b32.xlu0 %v616, 64
  %v620 = vpop.permute.xlu0 %619
  %v622 = vmul.f32 %v615, %v620
  %624 = vrot.lane.b32.xlu0 %v622, 32
  %v625 = vpop.permute.xlu0 %624
  %v627 = vadd.f32 %v617, %v625
  %v628 = vtanh.pop %v627
  %630 = vrot.lane.b32.xlu0 %v628, 64
  %v631 = vpop.permute.xlu0 %630
  %v633 = vmul.f32 %v615, %v631
  %v634 = vpack.c.bf16 %v633, %v633
  %v636 = vrot.slane %v634, 3
  %v639 = vsel %vm102, %v634, %v636
  %641 = vrot.lane.b32.xlu0 %v639, 32
  %v642 = vpop.permute.xlu0 %641
  %s644 = scalar_lea.vmem %s2, 6
  %645 = vst.msk [vmem:[%s644] sm:$0x1] %vm110, %v642
  %s646 = scalar_lea.vmem %s0, 7
  %v647 = vld [vmem:[%s646] sm:$0x1]
  %v648 = vunpack.c.l.bf16 %v647
  %v649 = vld [vmem:[%s1] sm:$0xf]
  %v650 = vld [vmem:[%s1 + $0x4] sm:$0xf]
  %v651 = vld [vmem:[%s1 + $0x8] sm:$0xf]
  %v652 = vld [vmem:[%s1 + $0xc] sm:$0xf]
  %v653 = vunpack.c.l.b16 %v634
  %v654 = vpack.c.b16 %v653, %v653
  %655 = vrot.lane.b32.xlu0 %v654, 32
  %v656 = vpop.permute.xlu0 %655
  %v661 = vunpack.c.l.b16 %v649
  %v662 = vunpack.c.l.b16 %v650
  %v663 = vunpack.c.l.b16 %v651
  %v664 = vunpack.c.l.b16 %v652
  %v665 = vpack.c.b16 %v662, %v661
  %v666 = vpack.c.b16 %v664, %v663
  %v670 = vsel %vm40, %v656, 0
  %672 = vmatpush.bf16.msra.mxu0 0
  %673 = vmatpush.bf16.msra.mxu0 0
  %674 = vmatpush.bf16.msra.mxu0 0
  %675 = vmatpush.bf16.msra.mxu0 0
  %676 = vmatpush.bf16.msra.mxu0 0
  %677 = vmatpush.bf16.msra.mxu0 0
  %678 = vmatpush.bf16.msra.mxu0 %v666
  %679 = vmatpush.bf16.msra.mxu0 %v665
  %680 = vmatmul.bf16.gmra.mxu0 %v670
  %v681 = vpop.f32.mrf.mxu0
  %v682 = vadd.f32 0.0, %v681
  %v683 = vpop.f32.mrf.mxu0
  %684 = vdwg.mxu0
  %v685 = vadd.f32 %v648, %v682
  %v686 = vxor.u32 %v685, 2147483648
  %v687 = vmul.f32 %v686, 1.442695
  %v688 = vpow.pop %v687
  %v689 = vadd.f32 %v688, 1.0
  %v690 = vrcp.pop %v689
  %v691 = vmul.f32 %v689, %v690
  %v692 = vsub.f32 1.0, %v691
  %v693 = vmul.f32 %v690, %v692
  %v694 = vadd.f32 %v690, %v693
  %vm695 = vweird.f32 %v689
  %vm696 = vweird.f32 %v690
  %vm697 = vmor %vm695, %vm696
  %v698 = vsel %vm697, %v690, %v694
  %v699 = vand.u32 2147483647, %v689
  %vm700 = vcmp.eq.f32.partialorder %v699, 8.507059e+37
  %v701 = vand.u32 %v689, 2147483648
  %v702 = vor.u32 1.1754944e-38, %v701
  %v703 = vsel %vm700, %v702, %v698
  %v704 = vmul.f32 1.0, %v703
  %v705 = vtanh.pop %v685
  %v706 = vmul.f32 %v704, %v627
  %708 = vrot.lane.b32.xlu0 %v705, 64
  %v709 = vpop.permute.xlu0 %708
  %v711 = vmul.f32 %v704, %v709
  %713 = vrot.lane.b32.xlu0 %v711, 32
  %v714 = vpop.permute.xlu0 %713
  %v716 = vadd.f32 %v706, %v714
  %v717 = vtanh.pop %v716
  %719 = vrot.lane.b32.xlu0 %v717, 64
  %v720 = vpop.permute.xlu0 %719
  %v722 = vmul.f32 %v704, %v720
  %v723 = vpack.c.bf16 %v722, %v722
  %v725 = vrot.slane %v723, 3
  %v728 = vsel %vm102, %v723, %v725
  %730 = vrot.lane.b32.xlu0 %v728, 32
  %v731 = vpop.permute.xlu0 %730
  %s733 = scalar_lea.vmem %s2, 7
  %734 = vst.msk [vmem:[%s733] sm:$0x1] %vm110, %v731
  %736 = vst [vmem:[#allocation1] ss:$4 sm:$0xff] %v722
  %v737 = vld.sshfl [vmem:[#allocation1] sm:$0xff pattern:$0x73625140]
  %738 = vrot.lane.b32.xlu0 %v737, 32
  %v739 = vpop.permute.xlu0 %738
  %vm741 = vcmask 254976
  %742 = vst.msk [vmem:[#allocation2] sm:$0x3] %vm741, %v739
  %744 = vst [vmem:[#allocation1] ss:$4 sm:$0xff] %v716
  %v745 = vld.sshfl [vmem:[#allocation1] sm:$0xff pattern:$0x73625140]
  %746 = vrot.lane.b32.xlu0 %v745, 96
  %v747 = vpop.permute.xlu0 %746
  %749 = vst.msk [vmem:[#allocation3] sm:$0x3] %vm741, %v747
  // Predicated region
  $region14: #{unsup_emb_forward.2} parent=0 // pred_check
    _
  $region15: #{unsup_emb_forward.2} parent=0 // pred_check_branch
    %751 = sbr.rel (0) target = $region17
  $region16: #{unsup_emb_forward.2} parent=0 // pred_region
    _
  $region17: #{unsup_emb_forward.2} parent=0 // pred_fallthru
    _
  // Predicated region
  $region18: #{unsup_emb_forward.2} parent=0 // pred_check
    _
  $region19: #{unsup_emb_forward.2} parent=0 // pred_check_branch
    %753 = sbr.rel (0) target = $region21
  $region20: #{unsup_emb_forward.2} parent=0 // pred_region
    _
  $region21: #{unsup_emb_forward.2} parent=0 // pred_fallthru
    _

</llo_original>
